<compile_context>
chip_gen: v7x
topology: tpu7x:2x2x1
jax: 0.10.0
libtpu: 0.0.40
codegen_flags: <defaults>
</compile_context>

<pallas_src>
import functools

import jax
import jax.numpy as jnp
from jax.experimental import pallas as pl
from jax.experimental.pallas import tpu as pltpu

BN_EPS = 1e-5
PAD = 16  # per-segment guard width; must be >= max dilation (9) and >= main-kernel-1 (3)


def _elu(v):
    # ELU(alpha=1): x if x > 0 else exp(x) - 1  (clamp exp arg for safety)
    return jnp.where(v > 0, v, jnp.exp(jnp.minimum(v, 0.0)) - 1.0)


def film_down_kernel(x_ref, w3_ref, w1_ref, bres_ref, wm_ref, bm_ref,
                     out_ref, pad_ref, *, stride):
    BB, C, L = x_ref.shape
    Cout = out_ref.shape[1]
    Lout = out_ref.shape[2]
    KM = wm_ref.shape[1] // C          # main conv kernel size (= 2 * stride)
    SL = L + 2 * PAD                   # scratch slot width per batch segment

    # ---- zero only the guard columns; interiors are always fully rewritten below.
    # Re-zeroed every grid step (2*BB tiny [C, PAD] stores) so the grid axis is safe to
    # mark "parallel" (each TensorCore owns its own scratch, no cross-step state).
    zeros_guard = jnp.zeros((C, PAD), jnp.float32)
    for b in range(BB):
        pad_ref[:, b * SL:b * SL + PAD] = zeros_guard
        pad_ref[:, b * SL + PAD + L:(b + 1) * SL] = zeros_guard

    # ---- fold the batch block onto the lane axis: [C, BB*L]
    if BB == 1:
        x = x_ref[0]
    else:
        x = jnp.concatenate([x_ref[b] for b in range(BB)], axis=-1)

    def stash(h):
        # write each batch segment into the interior of its guarded scratch slot
        for b in range(BB):
            pad_ref[:, b * SL + PAD:b * SL + PAD + L] = h[:, b * L:(b + 1) * L]

    def window(off):
        # folded [C, BB*L] view of the stashed activation shifted by `off` inside each
        # batch segment (guard columns supply the zero padding).
        parts = [pad_ref[:, b * SL + PAD + off:b * SL + PAD + off + L]
                 for b in range(BB)]
        return parts[0] if BB == 1 else jnp.concatenate(parts, axis=-1)

    def conv3(h, i, d):
        # k=3 dilated 'same' conv (BN folded) + ELU -- all 3 taps fused in one matmul.
        stash(h)
        hs = jnp.concatenate([window(-d), h, window(d)], axis=0)     # [3C, BB*L]
        y = jnp.dot(w3_ref[i], hs, preferred_element_type=jnp.float32)
        return _elu(y + bres_ref[2 * i])

    def conv1(h, i):
        # 1x1 conv (BN folded) + ELU
        y = jnp.dot(w1_ref[i], h, preferred_element_type=jnp.float32)
        return _elu(y + bres_ref[2 * i + 1])

    o1 = x
    o3 = conv1(conv3(o1, 0, 1), 0)
    s13 = o1 + o3
    o5 = conv1(conv3(s13, 1, 3), 1)
    s135 = s13 + o5
    o7 = conv1(conv3(s135, 2, 9), 2)
    u = s135 + o7                                                    # [C, BB*L]

    # ---- main conv: kernel=KM, stride, valid padding.
    # Fuse all KM taps into one matmul over a [KM*C, BB*L] stack, then decimate each batch
    # segment with a small in-kernel 0/1 matrix (replaces the 129 KB HBM selection matrix).
    # Tap columns that reach past a segment end only affect outputs the decimation discards.
    stash(u)
    u_stack = jnp.concatenate([window(k) for k in range(KM)], axis=0)   # [KM*C, BB*L]
    v = jnp.dot(wm_ref[...], u_stack, preferred_element_type=jnp.float32)  # [Cout, BB*L]

    li = jax.lax.broadcasted_iota(jnp.int32, (L, Lout), 0)
    ti = jax.lax.broadcasted_iota(jnp.int32, (L, Lout), 1)
    dec = (li == stride * ti).astype(jnp.float32)                    # [L, Lout]

    bm = bm_ref[...]
    for b in range(BB):
        vb = v[:, b * L:(b + 1) * L]                                 # lane-aligned slice
        yb = jnp.dot(vb, dec, preferred_element_type=jnp.float32)    # [Cout, Lout]
        out_ref[b] = _elu(yb + bm)


def _rep_spec(shape):
    nd = len(shape)
    return pl.BlockSpec(shape, lambda g, _nd=nd: (0,) * _nd)


@functools.partial(jax.jit, static_argnames=("stride",))
def film_downsampling(x, kernel_params, stride=2):
    """x: [B, C, L] float32.  kernel_params: (w3, w1, bres, wm, bm) packed/folded weights."""
    B, C, L = x.shape
    w3, w1, bres, wm, bm = kernel_params
    Cout = wm.shape[0]
    KM = wm.shape[1] // C
    Lout = (L - KM) // stride + 1

    # Fold as many batch elements as evenly divide B onto the lane axis (cap ~1024 lanes).
    BB = 1
    while B % (2 * BB) == 0 and 2 * BB * L <= 1024:
        BB *= 2

    grid_spec = pltpu.PrefetchScalarGridSpec(
        num_scalar_prefetch=0,
        grid=(B // BB,),
        in_specs=[
            pl.BlockSpec((BB, C, L), lambda g: (g, 0, 0)),           # x (batch block)
            _rep_spec(w3.shape), _rep_spec(w1.shape), _rep_spec(bres.shape),
            _rep_spec(wm.shape), _rep_spec(bm.shape),
        ],
        out_specs=pl.BlockSpec((BB, Cout, Lout), lambda g: (g, 0, 0)),
        scratch_shapes=[pltpu.VMEM((C, BB * (L + 2 * PAD)), jnp.float32)],
    )

    return pl.pallas_call(
        functools.partial(film_down_kernel, stride=stride),
        out_shape=jax.ShapeDtypeStruct((B, Cout, Lout), jnp.float32),
        grid_spec=grid_spec,
        # Disjoint output block per batch block, no cross-step state -> safe to shard
        # across TensorCores (v7x); no downside on single-TC parts.
        compiler_params=pltpu.CompilerParams(dimension_semantics=("parallel",)),
    )(x, w3, w1, bres, wm, bm)


# ---------------------------------------------------------------------------
# Parameter construction (deterministic, synthetic) + pure-JAX reference.
# ---------------------------------------------------------------------------

def make_raw_block(key, cin, cout, K):
    k1, k2, k3, k4, k5, k6 = jax.random.split(key, 6)
    W = 0.2 * jax.random.normal(k1, (cout, cin, K), jnp.float32)
    b = 0.1 * jax.random.normal(k2, (cout,), jnp.float32)
    gamma = 1.0 + 0.1 * jax.random.normal(k3, (cout,), jnp.float32)
    beta = 0.1 * jax.random.normal(k4, (cout,), jnp.float32)
    mean = 0.1 * jax.random.normal(k5, (cout,), jnp.float32)
    var = jax.random.uniform(k6, (cout,), jnp.float32, minval=0.5, maxval=1.5)
    return (W, b, gamma, beta, mean, var)


def fold_bn(p):
    W, b, g, be, mu, var = p
    scale = g / jnp.sqrt(var + BN_EPS)
    Wf = W * scale[:, None, None]
    bf = (b - mu) * scale + be
    return Wf, bf


def ref_block(h, p, K, dilation=1, stride=1, same=True):
    W, b, g, be, mu, var = p
    if same:
        pad = dilation * (K - 1) // 2
        padding = [(pad, pad)]
    else:
        padding = [(0, 0)]
    y = jax.lax.conv_general_dilated(
        h, W, window_strides=(stride,), padding=padding,
        rhs_dilation=(dilation,), dimension_numbers=("NCH", "OIH", "NCH"))
    y = y + b[None, :, None]
    y = (y - mu[None, :, None]) / jnp.sqrt(var[None, :, None] + BN_EPS)
    y = y * g[None, :, None] + be[None, :, None]
    return _elu(y)


def ref_forward(x, raw):
    p11, p12, p21, p22, p31, p32, pm = raw
    o1 = x
    o2 = ref_block(o1, p11, 3, dilation=1)
    o3 = ref_block(o2, p12, 1)
    o4 = ref_block(o3 + o1, p21, 3, dilation=3)
    o5 = ref_block(o4, p22, 1)
    o6 = ref_block(o1 + o3 + o5, p31, 3, dilation=9)
    o7 = ref_block(o6, p32, 1)
    o8 = ref_block(o1 + o3 + o5 + o7, pm, 4, stride=2, same=False)
    return o8


if __name__ == "__main__":
    B, C_IN, C_OUT, L, STRIDE = 2, 8, 16, 128, 2
    KM = 2 * STRIDE                       # main conv kernel size = 4
    LOUT = (L - KM) // STRIDE + 1         # 63

    key = jax.random.PRNGKey(0)
    keys = jax.random.split(key, 8)
    x = jax.random.normal(keys[0], (B, C_IN, L), jnp.float32)

    p11 = make_raw_block(keys[1], C_IN, C_IN, 3)
    p12 = make_raw_block(keys[2], C_IN, C_IN, 1)
    p21 = make_raw_block(keys[3], C_IN, C_IN, 3)
    p22 = make_raw_block(keys[4], C_IN, C_IN, 1)
    p31 = make_raw_block(keys[5], C_IN, C_IN, 3)
    p32 = make_raw_block(keys[6], C_IN, C_IN, 1)
    pm = make_raw_block(keys[7], C_IN, C_OUT, KM)
    raw = (p11, p12, p21, p22, p31, p32, pm)

    # Fold BN (eval mode) into conv weights and pack everything into 5 arrays
    # (tap-fused layouts: dilated conv -> [C, 3C], main conv -> [Cout, KM*C]).
    def fuse3(p):
        W, b = fold_bn(p)                      # W: [C, C, 3]
        return jnp.concatenate([W[:, :, 0], W[:, :, 1], W[:, :, 2]], axis=1), b

    def fuse1(p):
        W, b = fold_bn(p)                      # W: [C, C, 1]
        return W[:, :, 0], b

    w11, b11 = fuse3(p11); w12, b12 = fuse1(p12)
    w21, b21 = fuse3(p21); w22, b22 = fuse1(p22)
    w31, b31 = fuse3(p31); w32, b32 = fuse1(p32)
    w3 = jnp.stack([w11, w21, w31])                                  # [3, C, 3C]
    w1 = jnp.stack([w12, w22, w32])                                  # [3, C, C]
    bres = jnp.stack([b11, b12, b21, b22, b31, b32])[:, :, None]     # [6, C, 1]
    Wm, bmv = fold_bn(pm)                                            # [Cout, C, KM]
    wm = jnp.concatenate([Wm[:, :, k] for k in range(KM)], axis=1)   # [Cout, KM*C]
    bm = bmv.reshape(-1, 1)                                          # [Cout, 1]
    params = (w3, w1, bres, wm, bm)

    out = film_downsampling(x, params, stride=STRIDE)
    out = jax.block_until_ready(out)

    ref = ref_forward(x, raw)
    assert out.shape == (B, C_OUT, LOUT), out.shape
    max_err = float(jnp.max(jnp.abs(out - ref)))
    assert max_err < 2e-3, f"mismatch vs reference: {max_err}"

    print("KERNEL_OK")
</pallas_src>

<mosaic_0001>
module attributes {stable_mosaic.version = 11 : i64} {
  func.func @film_down_kernel(%arg0: i32, %arg1: memref<2x8x128xf32, #tpu.memory_space<vmem>>, %arg2: memref<3x8x24xf32, #tpu.memory_space<vmem>>, %arg3: memref<3x8x8xf32, #tpu.memory_space<vmem>>, %arg4: memref<6x8x1xf32, #tpu.memory_space<vmem>>, %arg5: memref<16x32xf32, #tpu.memory_space<vmem>>, %arg6: memref<16x1xf32, #tpu.memory_space<vmem>>, %arg7: memref<2x16x63xf32, #tpu.memory_space<vmem>>, %arg8: memref<8x320xf32, #tpu.memory_space<vmem>>) attributes {dimension_semantics = [#tpu.dimension_semantics<parallel>], iteration_bounds = array<i64: 1>, scalar_prefetch = 0 : i64, scratch_operands = 1 : i64, tpu.core_type = #tpu.core_type<tc>, window_params = [{transform_indices = @transform_0, window_bounds = array<i64: 2, 8, 128>}, {pipeline_mode = #tpu.pipeline_mode<synchronous>, transform_indices = @transform_1, window_bounds = array<i64: 3, 8, 24>}, {pipeline_mode = #tpu.pipeline_mode<synchronous>, transform_indices = @transform_2, window_bounds = array<i64: 3, 8, 8>}, {pipeline_mode = #tpu.pipeline_mode<synchronous>, transform_indices = @transform_3, window_bounds = array<i64: 6, 8, 1>}, {pipeline_mode = #tpu.pipeline_mode<synchronous>, transform_indices = @transform_4, window_bounds = array<i64: 16, 32>}, {pipeline_mode = #tpu.pipeline_mode<synchronous>, transform_indices = @transform_5, window_bounds = array<i64: 16, 1>}, {transform_indices = @transform_6, window_bounds = array<i64: 2, 16, 63>}]} {
    %cst = arith.constant 0.000000e+00 : f32
    %0 = vector.broadcast %cst : f32 to vector<8x16xf32>
    %c0 = arith.constant 0 : index
    %c0_0 = arith.constant 0 : index
    %1 = vector.load %arg8[%c0, %c0_0] : memref<8x320xf32, #tpu.memory_space<vmem>>, vector<8x16xf32>
    tpu.vector_store %arg8[%c0, %c0_0], %0 {strides = array<i32>} : memref<8x320xf32, #tpu.memory_space<vmem>>, vector<8x16xf32>,
    %c0_1 = arith.constant 0 : index
    %c144 = arith.constant 144 : index
    %2 = vector.load %arg8[%c0_1, %c144] : memref<8x320xf32, #tpu.memory_space<vmem>>, vector<8x16xf32>
    tpu.vector_store %arg8[%c0_1, %c144], %0 {strides = array<i32>} : memref<8x320xf32, #tpu.memory_space<vmem>>, vector<8x16xf32>,
    %c0_2 = arith.constant 0 : index
    %c160 = arith.constant 160 : index
    %3 = vector.load %arg8[%c0_2, %c160] : memref<8x320xf32, #tpu.memory_space<vmem>>, vector<8x16xf32>
    tpu.vector_store %arg8[%c0_2, %c160], %0 {strides = array<i32>} : memref<8x320xf32, #tpu.memory_space<vmem>>, vector<8x16xf32>,
    %c0_3 = arith.constant 0 : index
    %c304 = arith.constant 304 : index
    %4 = vector.load %arg8[%c0_3, %c304] : memref<8x320xf32, #tpu.memory_space<vmem>>, vector<8x16xf32>
    tpu.vector_store %arg8[%c0_3, %c304], %0 {strides = array<i32>} : memref<8x320xf32, #tpu.memory_space<vmem>>, vector<8x16xf32>,
    %c0_4 = arith.constant 0 : index
    %c0_5 = arith.constant 0 : index
    %c0_6 = arith.constant 0 : index
    %5 = vector.load %arg1[%c0_4, %c0_5, %c0_6] : memref<2x8x128xf32, #tpu.memory_space<vmem>>, vector<1x8x128xf32>
    %6 = vector.shape_cast %5 : vector<1x8x128xf32> to vector<8x128xf32>
    %c1 = arith.constant 1 : index
    %c0_7 = arith.constant 0 : index
    %c0_8 = arith.constant 0 : index
    %7 = vector.load %arg1[%c1, %c0_7, %c0_8] : memref<2x8x128xf32, #tpu.memory_space<vmem>>, vector<1x8x128xf32>
    %8 = vector.shape_cast %7 : vector<1x8x128xf32> to vector<8x128xf32>
    %9 = tpu.concatenate %6, %8 in 1 : vector<8x128xf32>, vector<8x128xf32> -> vector<8x256xf32>
    %10 = vector.extract_strided_slice %9 {offsets = [0, 0], sizes = [8, 128], strides = [1, 1]} : vector<8x256xf32> to vector<8x128xf32>
    %c0_9 = arith.constant 0 : index
    %c16 = arith.constant 16 : index
    %11 = vector.load %arg8[%c0_9, %c16] : memref<8x320xf32, #tpu.memory_space<vmem>>, vector<8x128xf32>
    tpu.vector_store %arg8[%c0_9, %c16], %10 {strides = array<i32>} : memref<8x320xf32, #tpu.memory_space<vmem>>, vector<8x128xf32>,
    %12 = vector.extract_strided_slice %9 {offsets = [0, 128], sizes = [8, 128], strides = [1, 1]} : vector<8x256xf32> to vector<8x128xf32>
    %c0_10 = arith.constant 0 : index
    %c176 = arith.constant 176 : index
    %13 = vector.load %arg8[%c0_10, %c176] : memref<8x320xf32, #tpu.memory_space<vmem>>, vector<8x128xf32>
    tpu.vector_store %arg8[%c0_10, %c176], %12 {strides = array<i32>} : memref<8x320xf32, #tpu.memory_space<vmem>>, vector<8x128xf32>,
    %c0_11 = arith.constant 0 : index
    %c15 = arith.constant 15 : index
    %14 = vector.load %arg8[%c0_11, %c15] : memref<8x320xf32, #tpu.memory_space<vmem>>, vector<8x128xf32>
    %c0_12 = arith.constant 0 : index
    %c175 = arith.constant 175 : index
    %15 = vector.load %arg8[%c0_12, %c175] : memref<8x320xf32, #tpu.memory_space<vmem>>, vector<8x128xf32>
    %16 = tpu.concatenate %14, %15 in 1 : vector<8x128xf32>, vector<8x128xf32> -> vector<8x256xf32>
    %c0_13 = arith.constant 0 : index
    %c17 = arith.constant 17 : index
    %17 = vector.load %arg8[%c0_13, %c17] : memref<8x320xf32, #tpu.memory_space<vmem>>, vector<8x128xf32>
    %c0_14 = arith.constant 0 : index
    %c177 = arith.constant 177 : index
    %18 = vector.load %arg8[%c0_14, %c177] : memref<8x320xf32, #tpu.memory_space<vmem>>, vector<8x128xf32>
    %19 = tpu.concatenate %17, %18 in 1 : vector<8x128xf32>, vector<8x128xf32> -> vector<8x256xf32>
    %20 = tpu.concatenate %16, %9, %19 in 0 : vector<8x256xf32>, vector<8x256xf32>, vector<8x256xf32> -> vector<24x256xf32>
    %c0_15 = arith.constant 0 : index
    %c0_16 = arith.constant 0 : index
    %c0_17 = arith.constant 0 : index
    %21 = vector.load %arg2[%c0_15, %c0_16, %c0_17] : memref<3x8x24xf32, #tpu.memory_space<vmem>>, vector<1x8x24xf32>
    %22 = vector.shape_cast %21 : vector<1x8x24xf32> to vector<8x24xf32>
    %cst_18 = arith.constant dense<0.000000e+00> : vector<8x256xf32>
    %23 = tpu.matmul %22, %20, %cst_18 {dimension_numbers = #tpu.dot_dimension_numbers<[1], [0], [0], [1], [0, 0, 1, 1], [], []>} : vector<8x24xf32>, vector<24x256xf32>, vector<8x256xf32> -> vector<8x256xf32>
    %c0_19 = arith.constant 0 : index
    %c0_20 = arith.constant 0 : index
    %c0_21 = arith.constant 0 : index
    %24 = vector.load %arg4[%c0_19, %c0_20, %c0_21] : memref<6x8x1xf32, #tpu.memory_space<vmem>>, vector<1x8x1xf32>
    %25 = vector.shape_cast %24 : vector<1x8x1xf32> to vector<8x1xf32>
    %26 = vector.broadcast %25 : vector<8x1xf32> to vector<8x256xf32>
    %27 = arith.addf %23, %26 : vector<8x256xf32>
    %cst_22 = arith.constant 0.000000e+00 : f32
    %28 = vector.broadcast %cst_22 : f32 to vector<8x256xf32>
    %29 = arith.cmpf ogt, %27, %28 : vector<8x256xf32>
    %cst_23 = arith.constant 0.000000e+00 : f32
    %30 = vector.broadcast %cst_23 : f32 to vector<8x256xf32>
    %31 = arith.minimumf %27, %30 : vector<8x256xf32>
    %32 = math.exp %31 : vector<8x256xf32>
    %cst_24 = arith.constant 1.000000e+00 : f32
    %33 = vector.broadcast %cst_24 : f32 to vector<8x256xf32>
    %34 = arith.subf %32, %33 : vector<8x256xf32>
    %35 = arith.select %29, %27, %34 : vector<8x256xi1>, vector<8x256xf32>
    %c0_25 = arith.constant 0 : index
    %c0_26 = arith.constant 0 : index
    %c0_27 = arith.constant 0 : index
    %36 = vector.load %arg3[%c0_25, %c0_26, %c0_27] : memref<3x8x8xf32, #tpu.memory_space<vmem>>, vector<1x8x8xf32>
    %37 = vector.shape_cast %36 : vector<1x8x8xf32> to vector<8x8xf32>
    %cst_28 = arith.constant dense<0.000000e+00> : vector<8x256xf32>
    %38 = tpu.matmul %37, %35, %cst_28 {dimension_numbers = #tpu.dot_dimension_numbers<[1], [0], [0], [1], [0, 0, 1, 1], [], []>} : vector<8x8xf32>, vector<8x256xf32>, vector<8x256xf32> -> vector<8x256xf32>
    %c1_29 = arith.constant 1 : index
    %c0_30 = arith.constant 0 : index
    %c0_31 = arith.constant 0 : index
    %39 = vector.load %arg4[%c1_29, %c0_30, %c0_31] : memref<6x8x1xf32, #tpu.memory_space<vmem>>, vector<1x8x1xf32>
    %40 = vector.shape_cast %39 : vector<1x8x1xf32> to vector<8x1xf32>
    %41 = vector.broadcast %40 : vector<8x1xf32> to vector<8x256xf32>
    %42 = arith.addf %38, %41 : vector<8x256xf32>
    %cst_32 = arith.constant 0.000000e+00 : f32
    %43 = vector.broadcast %cst_32 : f32 to vector<8x256xf32>
    %44 = arith.cmpf ogt, %42, %43 : vector<8x256xf32>
    %cst_33 = arith.constant 0.000000e+00 : f32
    %45 = vector.broadcast %cst_33 : f32 to vector<8x256xf32>
    %46 = arith.minimumf %42, %45 : vector<8x256xf32>
    %47 = math.exp %46 : vector<8x256xf32>
    %cst_34 = arith.constant 1.000000e+00 : f32
    %48 = vector.broadcast %cst_34 : f32 to vector<8x256xf32>
    %49 = arith.subf %47, %48 : vector<8x256xf32>
    %50 = arith.select %44, %42, %49 : vector<8x256xi1>, vector<8x256xf32>
    %51 = arith.addf %9, %50 : vector<8x256xf32>
    %52 = vector.extract_strided_slice %51 {offsets = [0, 0], sizes = [8, 128], strides = [1, 1]} : vector<8x256xf32> to vector<8x128xf32>
    %c0_35 = arith.constant 0 : index
    %c16_36 = arith.constant 16 : index
    %53 = vector.load %arg8[%c0_35, %c16_36] : memref<8x320xf32, #tpu.memory_space<vmem>>, vector<8x128xf32>
    tpu.vector_store %arg8[%c0_35, %c16_36], %52 {strides = array<i32>} : memref<8x320xf32, #tpu.memory_space<vmem>>, vector<8x128xf32>,
    %54 = vector.extract_strided_slice %51 {offsets = [0, 128], sizes = [8, 128], strides = [1, 1]} : vector<8x256xf32> to vector<8x128xf32>
    %c0_37 = arith.constant 0 : index
    %c176_38 = arith.constant 176 : index
    %55 = vector.load %arg8[%c0_37, %c176_38] : memref<8x320xf32, #tpu.memory_space<vmem>>, vector<8x128xf32>
    tpu.vector_store %arg8[%c0_37, %c176_38], %54 {strides = array<i32>} : memref<8x320xf32, #tpu.memory_space<vmem>>, vector<8x128xf32>,
    %c0_39 = arith.constant 0 : index
    %c13 = arith.constant 13 : index
    %56 = vector.load %arg8[%c0_39, %c13] : memref<8x320xf32, #tpu.memory_space<vmem>>, vector<8x128xf32>
    %c0_40 = arith.constant 0 : index
    %c173 = arith.constant 173 : index
    %57 = vector.load %arg8[%c0_40, %c173] : memref<8x320xf32, #tpu.memory_space<vmem>>, vector<8x128xf32>
    %58 = tpu.concatenate %56, %57 in 1 : vector<8x128xf32>, vector<8x128xf32> -> vector<8x256xf32>
    %c0_41 = arith.constant 0 : index
    %c19 = arith.constant 19 : index
    %59 = vector.load %arg8[%c0_41, %c19] : memref<8x320xf32, #tpu.memory_space<vmem>>, vector<8x128xf32>
    %c0_42 = arith.constant 0 : index
    %c179 = arith.constant 179 : index
    %60 = vector.load %arg8[%c0_42, %c179] : memref<8x320xf32, #tpu.memory_space<vmem>>, vector<8x128xf32>
    %61 = tpu.concatenate %59, %60 in 1 : vector<8x128xf32>, vector<8x128xf32> -> vector<8x256xf32>
    %62 = tpu.concatenate %58, %51, %61 in 0 : vector<8x256xf32>, vector<8x256xf32>, vector<8x256xf32> -> vector<24x256xf32>
    %c1_43 = arith.constant 1 : index
    %c0_44 = arith.constant 0 : index
    %c0_45 = arith.constant 0 : index
    %63 = vector.load %arg2[%c1_43, %c0_44, %c0_45] : memref<3x8x24xf32, #tpu.memory_space<vmem>>, vector<1x8x24xf32>
    %64 = vector.shape_cast %63 : vector<1x8x24xf32> to vector<8x24xf32>
    %cst_46 = arith.constant dense<0.000000e+00> : vector<8x256xf32>
    %65 = tpu.matmul %64, %62, %cst_46 {dimension_numbers = #tpu.dot_dimension_numbers<[1], [0], [0], [1], [0, 0, 1, 1], [], []>} : vector<8x24xf32>, vector<24x256xf32>, vector<8x256xf32> -> vector<8x256xf32>
    %c2 = arith.constant 2 : index
    %c0_47 = arith.constant 0 : index
    %c0_48 = arith.constant 0 : index
    %66 = vector.load %arg4[%c2, %c0_47, %c0_48] : memref<6x8x1xf32, #tpu.memory_space<vmem>>, vector<1x8x1xf32>
    %67 = vector.shape_cast %66 : vector<1x8x1xf32> to vector<8x1xf32>
    %68 = vector.broadcast %67 : vector<8x1xf32> to vector<8x256xf32>
    %69 = arith.addf %65, %68 : vector<8x256xf32>
    %cst_49 = arith.constant 0.000000e+00 : f32
    %70 = vector.broadcast %cst_49 : f32 to vector<8x256xf32>
    %71 = arith.cmpf ogt, %69, %70 : vector<8x256xf32>
    %cst_50 = arith.constant 0.000000e+00 : f32
    %72 = vector.broadcast %cst_50 : f32 to vector<8x256xf32>
    %73 = arith.minimumf %69, %72 : vector<8x256xf32>
    %74 = math.exp %73 : vector<8x256xf32>
    %cst_51 = arith.constant 1.000000e+00 : f32
    %75 = vector.broadcast %cst_51 : f32 to vector<8x256xf32>
    %76 = arith.subf %74, %75 : vector<8x256xf32>
    %77 = arith.select %71, %69, %76 : vector<8x256xi1>, vector<8x256xf32>
    %c1_52 = arith.constant 1 : index
    %c0_53 = arith.constant 0 : index
    %c0_54 = arith.constant 0 : index
    %78 = vector.load %arg3[%c1_52, %c0_53, %c0_54] : memref<3x8x8xf32, #tpu.memory_space<vmem>>, vector<1x8x8xf32>
    %79 = vector.shape_cast %78 : vector<1x8x8xf32> to vector<8x8xf32>
    %cst_55 = arith.constant dense<0.000000e+00> : vector<8x256xf32>
    %80 = tpu.matmul %79, %77, %cst_55 {dimension_numbers = #tpu.dot_dimension_numbers<[1], [0], [0], [1], [0, 0, 1, 1], [], []>} : vector<8x8xf32>, vector<8x256xf32>, vector<8x256xf32> -> vector<8x256xf32>
    %c3 = arith.constant 3 : index
    %c0_56 = arith.constant 0 : index
    %c0_57 = arith.constant 0 : index
    %81 = vector.load %arg4[%c3, %c0_56, %c0_57] : memref<6x8x1xf32, #tpu.memory_space<vmem>>, vector<1x8x1xf32>
    %82 = vector.shape_cast %81 : vector<1x8x1xf32> to vector<8x1xf32>
    %83 = vector.broadcast %82 : vector<8x1xf32> to vector<8x256xf32>
    %84 = arith.addf %80, %83 : vector<8x256xf32>
    %cst_58 = arith.constant 0.000000e+00 : f32
    %85 = vector.broadcast %cst_58 : f32 to vector<8x256xf32>
    %86 = arith.cmpf ogt, %84, %85 : vector<8x256xf32>
    %cst_59 = arith.constant 0.000000e+00 : f32
    %87 = vector.broadcast %cst_59 : f32 to vector<8x256xf32>
    %88 = arith.minimumf %84, %87 : vector<8x256xf32>
    %89 = math.exp %88 : vector<8x256xf32>
    %cst_60 = arith.constant 1.000000e+00 : f32
    %90 = vector.broadcast %cst_60 : f32 to vector<8x256xf32>
    %91 = arith.subf %89, %90 : vector<8x256xf32>
    %92 = arith.select %86, %84, %91 : vector<8x256xi1>, vector<8x256xf32>
    %93 = arith.addf %51, %92 : vector<8x256xf32>
    %94 = vector.extract_strided_slice %93 {offsets = [0, 0], sizes = [8, 128], strides = [1, 1]} : vector<8x256xf32> to vector<8x128xf32>
    %c0_61 = arith.constant 0 : index
    %c16_62 = arith.constant 16 : index
    %95 = vector.load %arg8[%c0_61, %c16_62] : memref<8x320xf32, #tpu.memory_space<vmem>>, vector<8x128xf32>
    tpu.vector_store %arg8[%c0_61, %c16_62], %94 {strides = array<i32>} : memref<8x320xf32, #tpu.memory_space<vmem>>, vector<8x128xf32>,
    %96 = vector.extract_strided_slice %93 {offsets = [0, 128], sizes = [8, 128], strides = [1, 1]} : vector<8x256xf32> to vector<8x128xf32>
    %c0_63 = arith.constant 0 : index
    %c176_64 = arith.constant 176 : index
    %97 = vector.load %arg8[%c0_63, %c176_64] : memref<8x320xf32, #tpu.memory_space<vmem>>, vector<8x128xf32>
    tpu.vector_store %arg8[%c0_63, %c176_64], %96 {strides = array<i32>} : memref<8x320xf32, #tpu.memory_space<vmem>>, vector<8x128xf32>,
    %c0_65 = arith.constant 0 : index
    %c7 = arith.constant 7 : index
    %98 = vector.load %arg8[%c0_65, %c7] : memref<8x320xf32, #tpu.memory_space<vmem>>, vector<8x128xf32>
    %c0_66 = arith.constant 0 : index
    %c167 = arith.constant 167 : index
    %99 = vector.load %arg8[%c0_66, %c167] : memref<8x320xf32, #tpu.memory_space<vmem>>, vector<8x128xf32>
    %100 = tpu.concatenate %98, %99 in 1 : vector<8x128xf32>, vector<8x128xf32> -> vector<8x256xf32>
    %c0_67 = arith.constant 0 : index
    %c25 = arith.constant 25 : index
    %101 = vector.load %arg8[%c0_67, %c25] : memref<8x320xf32, #tpu.memory_space<vmem>>, vector<8x128xf32>
    %c0_68 = arith.constant 0 : index
    %c185 = arith.constant 185 : index
    %102 = vector.load %arg8[%c0_68, %c185] : memref<8x320xf32, #tpu.memory_space<vmem>>, vector<8x128xf32>
    %103 = tpu.concatenate %101, %102 in 1 : vector<8x128xf32>, vector<8x128xf32> -> vector<8x256xf32>
    %104 = tpu.concatenate %100, %93, %103 in 0 : vector<8x256xf32>, vector<8x256xf32>, vector<8x256xf32> -> vector<24x256xf32>
    %c2_69 = arith.constant 2 : index
    %c0_70 = arith.constant 0 : index
    %c0_71 = arith.constant 0 : index
    %105 = vector.load %arg2[%c2_69, %c0_70, %c0_71] : memref<3x8x24xf32, #tpu.memory_space<vmem>>, vector<1x8x24xf32>
    %106 = vector.shape_cast %105 : vector<1x8x24xf32> to vector<8x24xf32>
    %cst_72 = arith.constant dense<0.000000e+00> : vector<8x256xf32>
    %107 = tpu.matmul %106, %104, %cst_72 {dimension_numbers = #tpu.dot_dimension_numbers<[1], [0], [0], [1], [0, 0, 1, 1], [], []>} : vector<8x24xf32>, vector<24x256xf32>, vector<8x256xf32> -> vector<8x256xf32>
    %c4 = arith.constant 4 : index
    %c0_73 = arith.constant 0 : index
    %c0_74 = arith.constant 0 : index
    %108 = vector.load %arg4[%c4, %c0_73, %c0_74] : memref<6x8x1xf32, #tpu.memory_space<vmem>>, vector<1x8x1xf32>
    %109 = vector.shape_cast %108 : vector<1x8x1xf32> to vector<8x1xf32>
    %110 = vector.broadcast %109 : vector<8x1xf32> to vector<8x256xf32>
    %111 = arith.addf %107, %110 : vector<8x256xf32>
    %cst_75 = arith.constant 0.000000e+00 : f32
    %112 = vector.broadcast %cst_75 : f32 to vector<8x256xf32>
    %113 = arith.cmpf ogt, %111, %112 : vector<8x256xf32>
    %cst_76 = arith.constant 0.000000e+00 : f32
    %114 = vector.broadcast %cst_76 : f32 to vector<8x256xf32>
    %115 = arith.minimumf %111, %114 : vector<8x256xf32>
    %116 = math.exp %115 : vector<8x256xf32>
    %cst_77 = arith.constant 1.000000e+00 : f32
    %117 = vector.broadcast %cst_77 : f32 to vector<8x256xf32>
    %118 = arith.subf %116, %117 : vector<8x256xf32>
    %119 = arith.select %113, %111, %118 : vector<8x256xi1>, vector<8x256xf32>
    %c2_78 = arith.constant 2 : index
    %c0_79 = arith.constant 0 : index
    %c0_80 = arith.constant 0 : index
    %120 = vector.load %arg3[%c2_78, %c0_79, %c0_80] : memref<3x8x8xf32, #tpu.memory_space<vmem>>, vector<1x8x8xf32>
    %121 = vector.shape_cast %120 : vector<1x8x8xf32> to vector<8x8xf32>
    %cst_81 = arith.constant dense<0.000000e+00> : vector<8x256xf32>
    %122 = tpu.matmul %121, %119, %cst_81 {dimension_numbers = #tpu.dot_dimension_numbers<[1], [0], [0], [1], [0, 0, 1, 1], [], []>} : vector<8x8xf32>, vector<8x256xf32>, vector<8x256xf32> -> vector<8x256xf32>
    %c5 = arith.constant 5 : index
    %c0_82 = arith.constant 0 : index
    %c0_83 = arith.constant 0 : index
    %123 = vector.load %arg4[%c5, %c0_82, %c0_83] : memref<6x8x1xf32, #tpu.memory_space<vmem>>, vector<1x8x1xf32>
    %124 = vector.shape_cast %123 : vector<1x8x1xf32> to vector<8x1xf32>
    %125 = vector.broadcast %124 : vector<8x1xf32> to vector<8x256xf32>
    %126 = arith.addf %122, %125 : vector<8x256xf32>
    %cst_84 = arith.constant 0.000000e+00 : f32
    %127 = vector.broadcast %cst_84 : f32 to vector<8x256xf32>
    %128 = arith.cmpf ogt, %126, %127 : vector<8x256xf32>
    %cst_85 = arith.constant 0.000000e+00 : f32
    %129 = vector.broadcast %cst_85 : f32 to vector<8x256xf32>
    %130 = arith.minimumf %126, %129 : vector<8x256xf32>
    %131 = math.exp %130 : vector<8x256xf32>
    %cst_86 = arith.constant 1.000000e+00 : f32
    %132 = vector.broadcast %cst_86 : f32 to vector<8x256xf32>
    %133 = arith.subf %131, %132 : vector<8x256xf32>
    %134 = arith.select %128, %126, %133 : vector<8x256xi1>, vector<8x256xf32>
    %135 = arith.addf %93, %134 : vector<8x256xf32>
    %136 = vector.extract_strided_slice %135 {offsets = [0, 0], sizes = [8, 128], strides = [1, 1]} : vector<8x256xf32> to vector<8x128xf32>
    %c0_87 = arith.constant 0 : index
    %c16_88 = arith.constant 16 : index
    %137 = vector.load %arg8[%c0_87, %c16_88] : memref<8x320xf32, #tpu.memory_space<vmem>>, vector<8x128xf32>
    tpu.vector_store %arg8[%c0_87, %c16_88], %136 {strides = array<i32>} : memref<8x320xf32, #tpu.memory_space<vmem>>, vector<8x128xf32>,
    %138 = vector.extract_strided_slice %135 {offsets = [0, 128], sizes = [8, 128], strides = [1, 1]} : vector<8x256xf32> to vector<8x128xf32>
    %c0_89 = arith.constant 0 : index
    %c176_90 = arith.constant 176 : index
    %139 = vector.load %arg8[%c0_89, %c176_90] : memref<8x320xf32, #tpu.memory_space<vmem>>, vector<8x128xf32>
    tpu.vector_store %arg8[%c0_89, %c176_90], %138 {strides = array<i32>} : memref<8x320xf32, #tpu.memory_space<vmem>>, vector<8x128xf32>,
    %c0_91 = arith.constant 0 : index
    %c16_92 = arith.constant 16 : index
    %140 = vector.load %arg8[%c0_91, %c16_92] : memref<8x320xf32, #tpu.memory_space<vmem>>, vector<8x128xf32>
    %c0_93 = arith.constant 0 : index
    %c176_94 = arith.constant 176 : index
    %141 = vector.load %arg8[%c0_93, %c176_94] : memref<8x320xf32, #tpu.memory_space<vmem>>, vector<8x128xf32>
    %142 = tpu.concatenate %140, %141 in 1 : vector<8x128xf32>, vector<8x128xf32> -> vector<8x256xf32>
    %c0_95 = arith.constant 0 : index
    %c17_96 = arith.constant 17 : index
    %143 = vector.load %arg8[%c0_95, %c17_96] : memref<8x320xf32, #tpu.memory_space<vmem>>, vector<8x128xf32>
    %c0_97 = arith.constant 0 : index
    %c177_98 = arith.constant 177 : index
    %144 = vector.load %arg8[%c0_97, %c177_98] : memref<8x320xf32, #tpu.memory_space<vmem>>, vector<8x128xf32>
    %145 = tpu.concatenate %143, %144 in 1 : vector<8x128xf32>, vector<8x128xf32> -> vector<8x256xf32>
    %c0_99 = arith.constant 0 : index
    %c18 = arith.constant 18 : index
    %146 = vector.load %arg8[%c0_99, %c18] : memref<8x320xf32, #tpu.memory_space<vmem>>, vector<8x128xf32>
    %c0_100 = arith.constant 0 : index
    %c178 = arith.constant 178 : index
    %147 = vector.load %arg8[%c0_100, %c178] : memref<8x320xf32, #tpu.memory_space<vmem>>, vector<8x128xf32>
    %148 = tpu.concatenate %146, %147 in 1 : vector<8x128xf32>, vector<8x128xf32> -> vector<8x256xf32>
    %c0_101 = arith.constant 0 : index
    %c19_102 = arith.constant 19 : index
    %149 = vector.load %arg8[%c0_101, %c19_102] : memref<8x320xf32, #tpu.memory_space<vmem>>, vector<8x128xf32>
    %c0_103 = arith.constant 0 : index
    %c179_104 = arith.constant 179 : index
    %150 = vector.load %arg8[%c0_103, %c179_104] : memref<8x320xf32, #tpu.memory_space<vmem>>, vector<8x128xf32>
    %151 = tpu.concatenate %149, %150 in 1 : vector<8x128xf32>, vector<8x128xf32> -> vector<8x256xf32>
    %152 = tpu.concatenate %142, %145, %148, %151 in 0 : vector<8x256xf32>, vector<8x256xf32>, vector<8x256xf32>, vector<8x256xf32> -> vector<32x256xf32>
    %c0_105 = arith.constant 0 : index
    %c0_106 = arith.constant 0 : index
    %153 = vector.load %arg5[%c0_105, %c0_106] : memref<16x32xf32, #tpu.memory_space<vmem>>, vector<16x32xf32>
    %cst_107 = arith.constant dense<0.000000e+00> : vector<16x256xf32>
    %154 = tpu.matmul %153, %152, %cst_107 {dimension_numbers = #tpu.dot_dimension_numbers<[1], [0], [0], [1], [0, 0, 1, 1], [], []>} : vector<16x32xf32>, vector<32x256xf32>, vector<16x256xf32> -> vector<16x256xf32>
    %155 = tpu.iota {dimensions = array<i32: 0>} : vector<128x63xi32>
    %156 = tpu.iota {dimensions = array<i32: 1>} : vector<128x63xi32>
    %c2_i32 = arith.constant 2 : i32
    %157 = vector.broadcast %c2_i32 : i32 to vector<128x63xi32>
    %158 = arith.muli %157, %156 : vector<128x63xi32>
    %159 = arith.cmpi eq, %155, %158 : vector<128x63xi32>
    %160 = arith.extui %159 : vector<128x63xi1> to vector<128x63xi32>
    %161 = arith.sitofp %160 : vector<128x63xi32> to vector<128x63xf32>
    %c0_108 = arith.constant 0 : index
    %c0_109 = arith.constant 0 : index
    %162 = vector.load %arg6[%c0_108, %c0_109] : memref<16x1xf32, #tpu.memory_space<vmem>>, vector<16x1xf32>
    %163 = vector.extract_strided_slice %154 {offsets = [0, 0], sizes = [16, 128], strides = [1, 1]} : vector<16x256xf32> to vector<16x128xf32>
    %cst_110 = arith.constant dense<0.000000e+00> : vector<16x63xf32>
    %164 = tpu.matmul %163, %161, %cst_110 {dimension_numbers = #tpu.dot_dimension_numbers<[1], [0], [0], [1], [0, 0, 1, 1], [], []>} : vector<16x128xf32>, vector<128x63xf32>, vector<16x63xf32> -> vector<16x63xf32>
    %165 = vector.broadcast %162 : vector<16x1xf32> to vector<16x63xf32>
    %166 = arith.addf %164, %165 : vector<16x63xf32>
    %cst_111 = arith.constant 0.000000e+00 : f32
    %167 = vector.broadcast %cst_111 : f32 to vector<16x63xf32>
    %168 = arith.cmpf ogt, %166, %167 : vector<16x63xf32>
    %cst_112 = arith.constant 0.000000e+00 : f32
    %169 = vector.broadcast %cst_112 : f32 to vector<16x63xf32>
    %170 = arith.minimumf %166, %169 : vector<16x63xf32>
    %171 = math.exp %170 : vector<16x63xf32>
    %cst_113 = arith.constant 1.000000e+00 : f32
    %172 = vector.broadcast %cst_113 : f32 to vector<16x63xf32>
    %173 = arith.subf %171, %172 : vector<16x63xf32>
    %174 = arith.select %168, %166, %173 : vector<16x63xi1>, vector<16x63xf32>
    %c0_114 = arith.constant 0 : index
    %c0_115 = arith.constant 0 : index
    %c0_116 = arith.constant 0 : index
    %175 = vector.load %arg7[%c0_114, %c0_115, %c0_116] : memref<2x16x63xf32, #tpu.memory_space<vmem>>, vector<1x16x63xf32>
    %176 = vector.shape_cast %175 : vector<1x16x63xf32> to vector<16x63xf32>
    %177 = vector.shape_cast %174 : vector<16x63xf32> to vector<1x16x63xf32>
    tpu.vector_store %arg7[%c0_114, %c0_115, %c0_116], %177 {strides = array<i32>} : memref<2x16x63xf32, #tpu.memory_space<vmem>>, vector<1x16x63xf32>,
    %178 = vector.extract_strided_slice %154 {offsets = [0, 128], sizes = [16, 128], strides = [1, 1]} : vector<16x256xf32> to vector<16x128xf32>
    %cst_117 = arith.constant dense<0.000000e+00> : vector<16x63xf32>
    %179 = tpu.matmul %178, %161, %cst_117 {dimension_numbers = #tpu.dot_dimension_numbers<[1], [0], [0], [1], [0, 0, 1, 1], [], []>} : vector<16x128xf32>, vector<128x63xf32>, vector<16x63xf32> -> vector<16x63xf32>
    %180 = vector.broadcast %162 : vector<16x1xf32> to vector<16x63xf32>
    %181 = arith.addf %179, %180 : vector<16x63xf32>
    %cst_118 = arith.constant 0.000000e+00 : f32
    %182 = vector.broadcast %cst_118 : f32 to vector<16x63xf32>
    %183 = arith.cmpf ogt, %181, %182 : vector<16x63xf32>
    %cst_119 = arith.constant 0.000000e+00 : f32
    %184 = vector.broadcast %cst_119 : f32 to vector<16x63xf32>
    %185 = arith.minimumf %181, %184 : vector<16x63xf32>
    %186 = math.exp %185 : vector<16x63xf32>
    %cst_120 = arith.constant 1.000000e+00 : f32
    %187 = vector.broadcast %cst_120 : f32 to vector<16x63xf32>
    %188 = arith.subf %186, %187 : vector<16x63xf32>
    %189 = arith.select %183, %181, %188 : vector<16x63xi1>, vector<16x63xf32>
    %c1_121 = arith.constant 1 : index
    %c0_122 = arith.constant 0 : index
    %c0_123 = arith.constant 0 : index
    %190 = vector.load %arg7[%c1_121, %c0_122, %c0_123] : memref<2x16x63xf32, #tpu.memory_space<vmem>>, vector<1x16x63xf32>
    %191 = vector.shape_cast %190 : vector<1x16x63xf32> to vector<16x63xf32>
    %192 = vector.shape_cast %189 : vector<16x63xf32> to vector<1x16x63xf32>
    tpu.vector_store %arg7[%c1_121, %c0_122, %c0_123], %192 {strides = array<i32>} : memref<2x16x63xf32, #tpu.memory_space<vmem>>, vector<1x16x63xf32>,
    return
  }
  func.func @transform_0(%arg0: i32) -> (i32, i32, i32) {
    %c0_i32 = arith.constant 0 : i32
    %c0_i32_0 = arith.constant 0 : i32
    %c0_i32_1 = arith.constant 0 : i32
    return %arg0, %c0_i32, %c0_i32_0 : i32, i32, i32
  }
  func.func @transform_1(%arg0: i32) -> (i32, i32, i32) {
    %c0_i32 = arith.constant 0 : i32
    %c0_i32_0 = arith.constant 0 : i32
    %c0_i32_1 = arith.constant 0 : i32
    %c0_i32_2 = arith.constant 0 : i32
    return %c0_i32, %c0_i32_0, %c0_i32_1 : i32, i32, i32
  }
  func.func @transform_2(%arg0: i32) -> (i32, i32, i32) {
    %c0_i32 = arith.constant 0 : i32
    %c0_i32_0 = arith.constant 0 : i32
    %c0_i32_1 = arith.constant 0 : i32
    %c0_i32_2 = arith.constant 0 : i32
    return %c0_i32, %c0_i32_0, %c0_i32_1 : i32, i32, i32
  }
  func.func @transform_3(%arg0: i32) -> (i32, i32, i32) {
    %c0_i32 = arith.constant 0 : i32
    %c0_i32_0 = arith.constant 0 : i32
    %c0_i32_1 = arith.constant 0 : i32
    %c0_i32_2 = arith.constant 0 : i32
    return %c0_i32, %c0_i32_0, %c0_i32_1 : i32, i32, i32
  }
  func.func @transform_4(%arg0: i32) -> (i32, i32) {
    %c0_i32 = arith.constant 0 : i32
    %c0_i32_0 = arith.constant 0 : i32
    %c0_i32_1 = arith.constant 0 : i32
    return %c0_i32, %c0_i32_0 : i32, i32
  }
  func.func @transform_5(%arg0: i32) -> (i32, i32) {
    %c0_i32 = arith.constant 0 : i32
    %c0_i32_0 = arith.constant 0 : i32
    %c0_i32_1 = arith.constant 0 : i32
    return %c0_i32, %c0_i32_0 : i32, i32
  }
  func.func @transform_6(%arg0: i32) -> (i32, i32, i32) {
    %c0_i32 = arith.constant 0 : i32
    %c0_i32_0 = arith.constant 0 : i32
    %c0_i32_1 = arith.constant 0 : i32
    return %arg0, %c0_i32, %c0_i32_0 : i32, i32, i32
  }
}

</mosaic_0001>

<llo_original>
// kernel: film_downsampling.1
$region0: #{film_downsampling.1}
  #allocation0 [shape = 'u32[]', space=smem, size = 0x4, offset = 0x4, fixed_abs, tag = 'smem constant byte address 0x4 - core index']
  #allocation1 [shape = 'u32[144,128]{1,0:T(1,128)}', space=vmem, size = 0x12000, scoped, tag = 'internal scratch']
  #allocation2 [shape = 'f32[8,320]{1,0:T(8,128)}', space=vmem, size = 0x3000, scoped, tag = 'scratch operand']
  %s0 = inlined_call_operand.vmem [shape: f32[2,8,128], index: 0, kind: input, shape index: {}]
  %s1 = inlined_call_operand.vmem [shape: f32[3,8,24], index: 1, kind: input, shape index: {}]
  %s2 = inlined_call_operand.vmem [shape: f32[3,8,8], index: 2, kind: input, shape index: {}]
  %s3 = inlined_call_operand.vmem [shape: f32[6,8,1], index: 3, kind: input, shape index: {}]
  %s4 = inlined_call_operand.vmem [shape: f32[16,32], index: 4, kind: input, shape index: {}]
  %s5 = inlined_call_operand.vmem [shape: f32[16,1], index: 5, kind: input, shape index: {}]
  %s6 = inlined_call_operand.hbm [shape: f32[2,16,63], index: 6, kind: output, shape index: {}]
  %s7 = sld [smem:[#allocation0]]
  $region34: #{film_downsampling.1} parent=0
    _
  %s9 = ssub.s32 1, %s7
  %s10 = scalar_select 0, %s9, %s7
  $region1: #{film_downsampling.1} parent=0
    #allocation3 [shape = 'u8[16384]{0}', space=vmem, size = 0x4000, scoped, tag = 'output window, operand 0, single buffered']
    #allocation4 [shape = 's32[1]{0}', space=sflag, size = 0x4, scoped, tag = 'scoped memory for film_downsampling.1']
    %11 = vsyncpa [#allocation4], 0
    // Predicated region
    $region2: #{film_downsampling.1} parent=1 // pred_check
      _
    $region3: #{film_downsampling.1} parent=1 // pred_check_branch
      %13 = sbr.rel (0) target = $region5
    $region4: #{film_downsampling.1} parent=1 // pred_region
      _
    $region5: #{film_downsampling.1} parent=1 // pred_fallthru
      _
    // Predicated region
    $region6: #{film_downsampling.1} parent=1 // pred_check
      _
    $region7: #{film_downsampling.1} parent=1 // pred_check_branch
      %15 = sbr.rel (0) target = $region9
    $region8: #{film_downsampling.1} parent=1 // pred_region
      _
    $region9: #{film_downsampling.1} parent=1 // pred_fallthru
      _
    // Predicated region
    $region10: #{film_downsampling.1} parent=1 // pred_check
      _
    $region11: #{film_downsampling.1} parent=1 // pred_check_branch
      %17 = sbr.rel (0) target = $region13
    $region12: #{film_downsampling.1} parent=1 // pred_region
      _
    $region13: #{film_downsampling.1} parent=1 // pred_fallthru
      _
    // Predicated region
    $region14: #{film_downsampling.1} parent=1 // pred_check
      _
    $region15: #{film_downsampling.1} parent=1 // pred_check_branch
      %19 = sbr.rel (0) target = $region17
    $region16: #{film_downsampling.1} parent=1 // pred_region
      _
    $region17: #{film_downsampling.1} parent=1 // pred_fallthru
      _
    // Predicated region
    $region18: #{film_downsampling.1} parent=1 // pred_check
      _
    $region19: #{film_downsampling.1} parent=1 // pred_check_branch
      %21 = sbr.rel (0) target = $region21
    $region20: #{film_downsampling.1} parent=1 // pred_region
      _
    $region21: #{film_downsampling.1} parent=1 // pred_fallthru
      _
    // Predicated region
    $region22: #{film_downsampling.1} parent=1 // pred_check
      _
    $region23: #{film_downsampling.1} parent=1 // pred_check_branch
      %23 = sbr.rel (0) target = $region25
    $region24: #{film_downsampling.1} parent=1 // pred_region
      _
    $region25: #{film_downsampling.1} parent=1 // pred_fallthru
      _
    %vm24 = vcmask 130048
    %25 = vst.msk [vmem:[#allocation2] sm:$0xff] %vm24, 0.0
    %vm26 = vcmask 261248
    %27 = vst.msk [vmem:[#allocation2 + $0x8] sm:$0xff] %vm26, 0.0
    %vm28 = vcmask 392448
    %29 = vst.msk [vmem:[#allocation2 + $0x8] sm:$0xff] %vm28, 0.0
    %vm30 = vcmask 523648
    %31 = vst.msk [vmem:[#allocation2 + $0x10] sm:$0xff] %vm30, 0.0
    %v32 = vld [vmem:[%s0] sm:$0xff]
    %s33 = scalar_lea.vmem %s0, 8
    %v34 = vld [vmem:[%s33] sm:$0xff]
    %36 = vrot.lane.b32.xlu0 %v32, 16
    %v37 = vpop.permute.xlu0 %36
    %vm39 = vcmask 1047680
    %40 = vst.msk [vmem:[#allocation2] sm:$0xff] %vm39, %v37
    %41 = vst.msk [vmem:[#allocation2 + $0x8] sm:$0xff] %vm24, %v37
    %43 = vrot.lane.b32.xlu0 %v34, 48
    %v44 = vpop.permute.xlu0 %43
    %vm46 = vcmask 1047936
    %47 = vst.msk [vmem:[#allocation2 + $0x8] sm:$0xff] %vm46, %v44
    %vm48 = vcmask 392192
    %49 = vst.msk [vmem:[#allocation2 + $0x10] sm:$0xff] %vm48, %v44
    %v50 = vld [vmem:[#allocation2] sm:$0xff]
    %v51 = vld [vmem:[#allocation2 + $0x8] sm:$0xff]
    %v52 = vld [vmem:[#allocation2 + $0x10] sm:$0xff]
    %55 = vrot.lane.b32.xlu0 %v50, 113
    %v56 = vpop.permute.xlu0 %55
    %57 = vrot.lane.b32.xlu0 %v51, 113
    %v58 = vpop.permute.xlu0 %57
    %vm59 = vcmask 924672
    %v60 = vsel %vm59, %v56, %v58
    %63 = vrot.lane.b32.xlu0 %v51, 81
    %v64 = vpop.permute.xlu0 %63
    %65 = vrot.lane.b32.xlu0 %v52, 81
    %v66 = vpop.permute.xlu0 %65
    %vm67 = vcmask 662528
    %v68 = vsel %vm67, %v64, %v66
    %70 = vrot.lane.b32.xlu0 %v50, 111
    %v71 = vpop.permute.xlu0 %70
    %72 = vrot.lane.b32.xlu0 %v51, 111
    %v73 = vpop.permute.xlu0 %72
    %vm74 = vcmask 908288
    %v75 = vsel %vm74, %v71, %v73
    %77 = vrot.lane.b32.xlu0 %v51, 79
    %v78 = vpop.permute.xlu0 %77
    %79 = vrot.lane.b32.xlu0 %v52, 79
    %v80 = vpop.permute.xlu0 %79
    %vm81 = vcmask 646144
    %v82 = vsel %vm81, %v78, %v80
    %v84 = vld [vmem:[%s1] sm:$0xff]
    %v85 = vld [vmem:[%s3] sm:$0xff]
    %87 = vset.pattern.permute.xlu0 0
    %88 = vperm.xlu0 %87, %v85
    %v89 = vpop.permute.xlu0 %88
    %vm91 = vcmask 195584
    %v93 = vsel %vm91, %v84, 0
    %95 = vmatprep.subr.mxu0 %v68
    %96 = vmatpush1.msra.mxu0 %v60
    %97 = vmatprep.subr.mxu0 %v34
    %98 = vmatpush1.msra.mxu0 %v32
    %99 = vmatprep.subr.mxu0 %v82
    %100 = vmatpush1.msra.mxu0 %v75
    %101 = vmatprep.subr.mxu0 0.0
    %102 = vmatpush1.msra.mxu0 0.0
    %103 = vmatprep.subr.mxu0 0.0
    %104 = vmatpush1.msra.mxu0 0.0
    %105 = vmatprep.subr.mxu0 0.0
    %106 = vmatpush1.msra.mxu0 0.0
    %107 = vmatprep.subr.mxu0 0.0
    %108 = vmatpush1.msra.mxu0 0.0
    %109 = vmatprep.subr.mxu0 0.0
    %110 = vmatpush1.msra.mxu0 0.0
    %111 = vmatprep.subr.mxu0 0.0
    %112 = vmatpush1.msra.mxu0 0.0
    %113 = vmatprep.subr.mxu0 0.0
    %114 = vmatpush1.msra.mxu0 0.0
    %115 = vmatprep.subr.mxu0 0.0
    %116 = vmatpush1.msra.mxu0 0.0
    %117 = vmatprep.subr.mxu0 0.0
    %118 = vmatpush1.msra.mxu0 0.0
    %119 = vmatprep.subr.mxu0 0.0
    %120 = vmatpush1.msra.mxu0 0.0
    %121 = vmatprep.subr.mxu0 0.0
    %122 = vmatpush1.msra.mxu0 0.0
    %123 = vmatprep.subr.mxu0 0.0
    %124 = vmatpush1.msra.mxu0 0.0
    %125 = vmatprep.subr.mxu0 0.0
    %126 = vmatpush1.msra.mxu0 0.0
    %127 = vmatprep.subr.mxu0 0.0
    %128 = vmatpush1.msra.mxu0 0.0
    %129 = vmatprep.subr.mxu0 0.0
    %130 = vmatpush1.msra.mxu0 0.0
    %131 = vmatprep.subr.mxu0 0.0
    %132 = vmatpush1.msra.mxu0 0.0
    %133 = vmatprep.subr.mxu0 0.0
    %134 = vmatpush1.msra.mxu0 0.0
    %135 = vmatprep.subr.mxu0 0.0
    %136 = vmatpush1.msra.mxu0 0.0
    %137 = vmatprep.subr.mxu0 0.0
    %138 = vmatpush1.msra.mxu0 0.0
    %139 = vmatprep.subr.mxu0 0.0
    %140 = vmatpush1.msra.mxu0 0.0
    %141 = vmatprep.subr.mxu0 0.0
    %142 = vmatpush1.msra.mxu0 0.0
    %143 = vmatprep.subr.mxu0 0.0
    %144 = vmatpush1.msra.mxu0 0.0
    %145 = vmatprep.subr.mxu0 0.0
    %146 = vmatpush1.msra.mxu0 0.0
    %147 = vmatprep.subr.mxu0 0.0
    %148 = vmatpush1.msra.mxu0 0.0
    %149 = vmatprep.subr.mxu0 0.0
    %150 = vmatpush1.msra.mxu0 0.0
    %151 = vmatprep.subr.mxu0 0.0
    %152 = vmatpush1.msra.mxu0 0.0
    %153 = vmatprep.subr.mxu0 0.0
    %154 = vmatpush1.msra.mxu0 0.0
    %155 = vmatprep.subr.mxu0 0.0
    %156 = vmatpush1.msra.mxu0 0.0
    %157 = vmatprep.subr.mxu0 0.0
    %158 = vmatpush1.msra.mxu0 0.0
    %159 = vmatprep.mubr.f32.mxu0 0.0
    %160 = vmatmul.mubr.f32.gmra.mrb[0].mxu0 %v93
    %v161 = vpop.f32.mrb[0].mxu0
    %v162 = vadd.f32 %v89, %v161
    %v163 = vpop.f32.mrb[0].mxu0
    %v164 = vadd.f32 %v89, %v163
    %165 = vdwg.mxu0
    %vm166 = vcmp.gt.f32.partialorder %v162, 0.0
    %vm167 = vcmp.gt.f32.partialorder %v164, 0.0
    %v168 = vmin.f32 %v162, 0.0
    %v169 = vmin.f32 %v164, 0.0
    %v170 = vmul.f32 %v168, 1.442695
    %v171 = vpow.pop %v170
    %v172 = vmul.f32 %v169, 1.442695
    %v173 = vpow.pop %v172
    %v174 = vsub.f32 %v171, 1.0
    %v175 = vsub.f32 %v173, 1.0
    %v176 = vsel %vm166, %v162, %v174
    %v177 = vsel %vm167, %v164, %v175
    %v178 = vld [vmem:[%s2] sm:$0xff]
    %s179 = scalar_lea.vmem %s3, 8
    %v180 = vld [vmem:[%s179] sm:$0xff]
    %182 = vset.pattern.permute.xlu0 0
    %183 = vperm.xlu0 %182, %v180
    %v184 = vpop.permute.xlu0 %183
    %vm186 = vcmask 64512
    %v188 = vsel %vm186, %v178, 0
    %190 = vmatprep.subr.mxu0 %v177
    %191 = vmatpush1.msra.mxu0 %v176
    %192 = vmatprep.subr.mxu0 0.0
    %193 = vmatpush1.msra.mxu0 0.0
    %194 = vmatprep.subr.mxu0 0.0
    %195 = vmatpush1.msra.mxu0 0.0
    %196 = vmatprep.subr.mxu0 0.0
    %197 = vmatpush1.msra.mxu0 0.0
    %198 = vmatprep.subr.mxu0 0.0
    %199 = vmatpush1.msra.mxu0 0.0
    %200 = vmatprep.subr.mxu0 0.0
    %201 = vmatpush1.msra.mxu0 0.0
    %202 = vmatprep.subr.mxu0 0.0
    %203 = vmatpush1.msra.mxu0 0.0
    %204 = vmatprep.subr.mxu0 0.0
    %205 = vmatpush1.msra.mxu0 0.0
    %206 = vmatprep.subr.mxu0 0.0
    %207 = vmatpush1.msra.mxu0 0.0
    %208 = vmatprep.subr.mxu0 0.0
    %209 = vmatpush1.msra.mxu0 0.0
    %210 = vmatprep.subr.mxu0 0.0
    %211 = vmatpush1.msra.mxu0 0.0
    %212 = vmatprep.subr.mxu0 0.0
    %213 = vmatpush1.msra.mxu0 0.0
    %214 = vmatprep.subr.mxu0 0.0
    %215 = vmatpush1.msra.mxu0 0.0
    %216 = vmatprep.subr.mxu0 0.0
    %217 = vmatpush1.msra.mxu0 0.0
    %218 = vmatprep.subr.mxu0 0.0
    %219 = vmatpush1.msra.mxu0 0.0
    %220 = vmatprep.subr.mxu0 0.0
    %221 = vmatpush1.msra.mxu0 0.0
    %222 = vmatprep.subr.mxu0 0.0
    %223 = vmatpush1.msra.mxu0 0.0
    %224 = vmatprep.subr.mxu0 0.0
    %225 = vmatpush1.msra.mxu0 0.0
    %226 = vmatprep.subr.mxu0 0.0
    %227 = vmatpush1.msra.mxu0 0.0
    %228 = vmatprep.subr.mxu0 0.0
    %229 = vmatpush1.msra.mxu0 0.0
    %230 = vmatprep.subr.mxu0 0.0
    %231 = vmatpush1.msra.mxu0 0.0
    %232 = vmatprep.subr.mxu0 0.0
    %233 = vmatpush1.msra.mxu0 0.0
    %234 = vmatprep.subr.mxu0 0.0
    %235 = vmatpush1.msra.mxu0 0.0
    %236 = vmatprep.subr.mxu0 0.0
    %237 = vmatpush1.msra.mxu0 0.0
    %238 = vmatprep.subr.mxu0 0.0
    %239 = vmatpush1.msra.mxu0 0.0
    %240 = vmatprep.subr.mxu0 0.0
    %241 = vmatpush1.msra.mxu0 0.0
    %242 = vmatprep.subr.mxu0 0.0
    %243 = vmatpush1.msra.mxu0 0.0
    %244 = vmatprep.subr.mxu0 0.0
    %245 = vmatpush1.msra.mxu0 0.0
    %246 = vmatprep.subr.mxu0 0.0
    %247 = vmatpush1.msra.mxu0 0.0
    %248 = vmatprep.subr.mxu0 0.0
    %249 = vmatpush1.msra.mxu0 0.0
    %250 = vmatprep.subr.mxu0 0.0
    %251 = vmatpush1.msra.mxu0 0.0
    %252 = vmatprep.subr.mxu0 0.0
    %253 = vmatpush1.msra.mxu0 0.0
    %254 = vmatprep.mubr.f32.mxu0 0.0
    %255 = vmatmul.mubr.f32.gmra.mrb[0].mxu0 %v188
    %v256 = vpop.f32.mrb[0].mxu0
    %v257 = vadd.f32 %v184, %v256
    %v258 = vpop.f32.mrb[0].mxu0
    %v259 = vadd.f32 %v184, %v258
    %260 = vdwg.mxu0
    %vm261 = vcmp.gt.f32.partialorder %v257, 0.0
    %vm262 = vcmp.gt.f32.partialorder %v259, 0.0
    %v263 = vmin.f32 %v257, 0.0
    %v264 = vmin.f32 %v259, 0.0
    %v265 = vmul.f32 %v263, 1.442695
    %v266 = vpow.pop %v265
    %v267 = vmul.f32 %v264, 1.442695
    %v268 = vpow.pop %v267
    %v269 = vsub.f32 %v266, 1.0
    %v270 = vsub.f32 %v268, 1.0
    %v271 = vsel %vm261, %v257, %v269
    %v272 = vsel %vm262, %v259, %v270
    %v273 = vadd.f32 %v32, %v271
    %v274 = vadd.f32 %v34, %v272
    %276 = vrot.lane.b32.xlu0 %v273, 16
    %v277 = vpop.permute.xlu0 %276
    %279 = vst.msk [vmem:[#allocation2] sm:$0xff] %vm39, %v277
    %280 = vst.msk [vmem:[#allocation2 + $0x8] sm:$0xff] %vm24, %v277
    %282 = vrot.lane.b32.xlu0 %v274, 48
    %v283 = vpop.permute.xlu0 %282
    %285 = vst.msk [vmem:[#allocation2 + $0x8] sm:$0xff] %vm46, %v283
    %286 = vst.msk [vmem:[#allocation2 + $0x10] sm:$0xff] %vm48, %v283
    %v287 = vld [vmem:[#allocation2] sm:$0xff]
    %v288 = vld [vmem:[#allocation2 + $0x8] sm:$0xff]
    %v289 = vld [vmem:[#allocation2 + $0x10] sm:$0xff]
    %292 = vrot.lane.b32.xlu0 %v287, 115
    %v293 = vpop.permute.xlu0 %292
    %294 = vrot.lane.b32.xlu0 %v288, 115
    %v295 = vpop.permute.xlu0 %294
    %vm296 = vcmask 941056
    %v297 = vsel %vm296, %v293, %v295
    %300 = vrot.lane.b32.xlu0 %v288, 83
    %v301 = vpop.permute.xlu0 %300
    %302 = vrot.lane.b32.xlu0 %v289, 83
    %v303 = vpop.permute.xlu0 %302
    %vm304 = vcmask 678912
    %v305 = vsel %vm304, %v301, %v303
    %307 = vrot.lane.b32.xlu0 %v287, 109
    %v308 = vpop.permute.xlu0 %307
    %309 = vrot.lane.b32.xlu0 %v288, 109
    %v310 = vpop.permute.xlu0 %309
    %vm311 = vcmask 891904
    %v312 = vsel %vm311, %v308, %v310
    %314 = vrot.lane.b32.xlu0 %v288, 77
    %v315 = vpop.permute.xlu0 %314
    %316 = vrot.lane.b32.xlu0 %v289, 77
    %v317 = vpop.permute.xlu0 %316
    %vm318 = vcmask 629760
    %v319 = vsel %vm318, %v315, %v317
    %s321 = scalar_lea.vmem %s1, 8
    %v322 = vld [vmem:[%s321] sm:$0xff]
    %s323 = scalar_lea.vmem %s3, 16
    %v324 = vld [vmem:[%s323] sm:$0xff]
    %326 = vset.pattern.permute.xlu0 0
    %327 = vperm.xlu0 %326, %v324
    %v328 = vpop.permute.xlu0 %327
    %v331 = vsel %vm91, %v322, 0
    %333 = vmatprep.subr.mxu0 %v305
    %334 = vmatpush1.msra.mxu0 %v297
    %335 = vmatprep.subr.mxu0 %v274
    %336 = vmatpush1.msra.mxu0 %v273
    %337 = vmatprep.subr.mxu0 %v319
    %338 = vmatpush1.msra.mxu0 %v312
    %339 = vmatprep.subr.mxu0 0.0
    %340 = vmatpush1.msra.mxu0 0.0
    %341 = vmatprep.subr.mxu0 0.0
    %342 = vmatpush1.msra.mxu0 0.0
    %343 = vmatprep.subr.mxu0 0.0
    %344 = vmatpush1.msra.mxu0 0.0
    %345 = vmatprep.subr.mxu0 0.0
    %346 = vmatpush1.msra.mxu0 0.0
    %347 = vmatprep.subr.mxu0 0.0
    %348 = vmatpush1.msra.mxu0 0.0
    %349 = vmatprep.subr.mxu0 0.0
    %350 = vmatpush1.msra.mxu0 0.0
    %351 = vmatprep.subr.mxu0 0.0
    %352 = vmatpush1.msra.mxu0 0.0
    %353 = vmatprep.subr.mxu0 0.0
    %354 = vmatpush1.msra.mxu0 0.0
    %355 = vmatprep.subr.mxu0 0.0
    %356 = vmatpush1.msra.mxu0 0.0
    %357 = vmatprep.subr.mxu0 0.0
    %358 = vmatpush1.msra.mxu0 0.0
    %359 = vmatprep.subr.mxu0 0.0
    %360 = vmatpush1.msra.mxu0 0.0
    %361 = vmatprep.subr.mxu0 0.0
    %362 = vmatpush1.msra.mxu0 0.0
    %363 = vmatprep.subr.mxu0 0.0
    %364 = vmatpush1.msra.mxu0 0.0
    %365 = vmatprep.subr.mxu0 0.0
    %366 = vmatpush1.msra.mxu0 0.0
    %367 = vmatprep.subr.mxu0 0.0
    %368 = vmatpush1.msra.mxu0 0.0
    %369 = vmatprep.subr.mxu0 0.0
    %370 = vmatpush1.msra.mxu0 0.0
    %371 = vmatprep.subr.mxu0 0.0
    %372 = vmatpush1.msra.mxu0 0.0
    %373 = vmatprep.subr.mxu0 0.0
    %374 = vmatpush1.msra.mxu0 0.0
    %375 = vmatprep.subr.mxu0 0.0
    %376 = vmatpush1.msra.mxu0 0.0
    %377 = vmatprep.subr.mxu0 0.0
    %378 = vmatpush1.msra.mxu0 0.0
    %379 = vmatprep.subr.mxu0 0.0
    %380 = vmatpush1.msra.mxu0 0.0
    %381 = vmatprep.subr.mxu0 0.0
    %382 = vmatpush1.msra.mxu0 0.0
    %383 = vmatprep.subr.mxu0 0.0
    %384 = vmatpush1.msra.mxu0 0.0
    %385 = vmatprep.subr.mxu0 0.0
    %386 = vmatpush1.msra.mxu0 0.0
    %387 = vmatprep.subr.mxu0 0.0
    %388 = vmatpush1.msra.mxu0 0.0
    %389 = vmatprep.subr.mxu0 0.0
    %390 = vmatpush1.msra.mxu0 0.0
    %391 = vmatprep.subr.mxu0 0.0
    %392 = vmatpush1.msra.mxu0 0.0
    %393 = vmatprep.subr.mxu0 0.0
    %394 = vmatpush1.msra.mxu0 0.0
    %395 = vmatprep.subr.mxu0 0.0
    %396 = vmatpush1.msra.mxu0 0.0
    %397 = vmatprep.mubr.f32.mxu0 0.0
    %398 = vmatmul.mubr.f32.gmra.mrb[0].mxu0 %v331
    %v399 = vpop.f32.mrb[0].mxu0
    %v400 = vadd.f32 %v328, %v399
    %v401 = vpop.f32.mrb[0].mxu0
    %v402 = vadd.f32 %v328, %v401
    %403 = vdwg.mxu0
    %vm404 = vcmp.gt.f32.partialorder %v400, 0.0
    %vm405 = vcmp.gt.f32.partialorder %v402, 0.0
    %v406 = vmin.f32 %v400, 0.0
    %v407 = vmin.f32 %v402, 0.0
    %v408 = vmul.f32 %v406, 1.442695
    %v409 = vpow.pop %v408
    %v410 = vmul.f32 %v407, 1.442695
    %v411 = vpow.pop %v410
    %v412 = vsub.f32 %v409, 1.0
    %v413 = vsub.f32 %v411, 1.0
    %v414 = vsel %vm404, %v400, %v412
    %v415 = vsel %vm405, %v402, %v413
    %s416 = scalar_lea.vmem %s2, 8
    %v417 = vld [vmem:[%s416] sm:$0xff]
    %s418 = scalar_lea.vmem %s3, 24
    %v419 = vld [vmem:[%s418] sm:$0xff]
    %421 = vset.pattern.permute.xlu0 0
    %422 = vperm.xlu0 %421, %v419
    %v423 = vpop.permute.xlu0 %422
    %v426 = vsel %vm186, %v417, 0
    %428 = vmatprep.subr.mxu0 %v415
    %429 = vmatpush1.msra.mxu0 %v414
    %430 = vmatprep.subr.mxu0 0.0
    %431 = vmatpush1.msra.mxu0 0.0
    %432 = vmatprep.subr.mxu0 0.0
    %433 = vmatpush1.msra.mxu0 0.0
    %434 = vmatprep.subr.mxu0 0.0
    %435 = vmatpush1.msra.mxu0 0.0
    %436 = vmatprep.subr.mxu0 0.0
    %437 = vmatpush1.msra.mxu0 0.0
    %438 = vmatprep.subr.mxu0 0.0
    %439 = vmatpush1.msra.mxu0 0.0
    %440 = vmatprep.subr.mxu0 0.0
    %441 = vmatpush1.msra.mxu0 0.0
    %442 = vmatprep.subr.mxu0 0.0
    %443 = vmatpush1.msra.mxu0 0.0
    %444 = vmatprep.subr.mxu0 0.0
    %445 = vmatpush1.msra.mxu0 0.0
    %446 = vmatprep.subr.mxu0 0.0
    %447 = vmatpush1.msra.mxu0 0.0
    %448 = vmatprep.subr.mxu0 0.0
    %449 = vmatpush1.msra.mxu0 0.0
    %450 = vmatprep.subr.mxu0 0.0
    %451 = vmatpush1.msra.mxu0 0.0
    %452 = vmatprep.subr.mxu0 0.0
    %453 = vmatpush1.msra.mxu0 0.0
    %454 = vmatprep.subr.mxu0 0.0
    %455 = vmatpush1.msra.mxu0 0.0
    %456 = vmatprep.subr.mxu0 0.0
    %457 = vmatpush1.msra.mxu0 0.0
    %458 = vmatprep.subr.mxu0 0.0
    %459 = vmatpush1.msra.mxu0 0.0
    %460 = vmatprep.subr.mxu0 0.0
    %461 = vmatpush1.msra.mxu0 0.0
    %462 = vmatprep.subr.mxu0 0.0
    %463 = vmatpush1.msra.mxu0 0.0
    %464 = vmatprep.subr.mxu0 0.0
    %465 = vmatpush1.msra.mxu0 0.0
    %466 = vmatprep.subr.mxu0 0.0
    %467 = vmatpush1.msra.mxu0 0.0
    %468 = vmatprep.subr.mxu0 0.0
    %469 = vmatpush1.msra.mxu0 0.0
    %470 = vmatprep.subr.mxu0 0.0
    %471 = vmatpush1.msra.mxu0 0.0
    %472 = vmatprep.subr.mxu0 0.0
    %473 = vmatpush1.msra.mxu0 0.0
    %474 = vmatprep.subr.mxu0 0.0
    %475 = vmatpush1.msra.mxu0 0.0
    %476 = vmatprep.subr.mxu0 0.0
    %477 = vmatpush1.msra.mxu0 0.0
    %478 = vmatprep.subr.mxu0 0.0
    %479 = vmatpush1.msra.mxu0 0.0
    %480 = vmatprep.subr.mxu0 0.0
    %481 = vmatpush1.msra.mxu0 0.0
    %482 = vmatprep.subr.mxu0 0.0
    %483 = vmatpush1.msra.mxu0 0.0
    %484 = vmatprep.subr.mxu0 0.0
    %485 = vmatpush1.msra.mxu0 0.0
    %486 = vmatprep.subr.mxu0 0.0
    %487 = vmatpush1.msra.mxu0 0.0
    %488 = vmatprep.subr.mxu0 0.0
    %489 = vmatpush1.msra.mxu0 0.0
    %490 = vmatprep.subr.mxu0 0.0
    %491 = vmatpush1.msra.mxu0 0.0
    %492 = vmatprep.mubr.f32.mxu0 0.0
    %493 = vmatmul.mubr.f32.gmra.mrb[0].mxu0 %v426
    %v494 = vpop.f32.mrb[0].mxu0
    %v495 = vadd.f32 %v423, %v494
    %v496 = vpop.f32.mrb[0].mxu0
    %v497 = vadd.f32 %v423, %v496
    %498 = vdwg.mxu0
    %vm499 = vcmp.gt.f32.partialorder %v495, 0.0
    %vm500 = vcmp.gt.f32.partialorder %v497, 0.0
    %v501 = vmin.f32 %v495, 0.0
    %v502 = vmin.f32 %v497, 0.0
    %v503 = vmul.f32 %v501, 1.442695
    %v504 = vpow.pop %v503
    %v505 = vmul.f32 %v502, 1.442695
    %v506 = vpow.pop %v505
    %v507 = vsub.f32 %v504, 1.0
    %v508 = vsub.f32 %v506, 1.0
    %v509 = vsel %vm499, %v495, %v507
    %v510 = vsel %vm500, %v497, %v508
    %v511 = vadd.f32 %v273, %v509
    %v512 = vadd.f32 %v274, %v510
    %514 = vrot.lane.b32.xlu0 %v511, 16
    %v515 = vpop.permute.xlu0 %514
    %517 = vst.msk [vmem:[#allocation2] sm:$0xff] %vm39, %v515
    %518 = vst.msk [vmem:[#allocation2 + $0x8] sm:$0xff] %vm24, %v515
    %520 = vrot.lane.b32.xlu0 %v512, 48
    %v521 = vpop.permute.xlu0 %520
    %523 = vst.msk [vmem:[#allocation2 + $0x8] sm:$0xff] %vm46, %v521
    %524 = vst.msk [vmem:[#allocation2 + $0x10] sm:$0xff] %vm48, %v521
    %v525 = vld [vmem:[#allocation2] sm:$0xff]
    %v526 = vld [vmem:[#allocation2 + $0x8] sm:$0xff]
    %v527 = vld [vmem:[#allocation2 + $0x10] sm:$0xff]
    %530 = vrot.lane.b32.xlu0 %v525, 121
    %v531 = vpop.permute.xlu0 %530
    %532 = vrot.lane.b32.xlu0 %v526, 121
    %v533 = vpop.permute.xlu0 %532
    %vm534 = vcmask 990208
    %v535 = vsel %vm534, %v531, %v533
    %538 = vrot.lane.b32.xlu0 %v526, 89
    %v539 = vpop.permute.xlu0 %538
    %540 = vrot.lane.b32.xlu0 %v527, 89
    %v541 = vpop.permute.xlu0 %540
    %vm542 = vcmask 728064
    %v543 = vsel %vm542, %v539, %v541
    %545 = vrot.lane.b32.xlu0 %v525, 103
    %v546 = vpop.permute.xlu0 %545
    %547 = vrot.lane.b32.xlu0 %v526, 103
    %v548 = vpop.permute.xlu0 %547
    %vm549 = vcmask 842752
    %v550 = vsel %vm549, %v546, %v548
    %552 = vrot.lane.b32.xlu0 %v526, 71
    %v553 = vpop.permute.xlu0 %552
    %554 = vrot.lane.b32.xlu0 %v527, 71
    %v555 = vpop.permute.xlu0 %554
    %vm556 = vcmask 580608
    %v557 = vsel %vm556, %v553, %v555
    %s559 = scalar_lea.vmem %s1, 16
    %v560 = vld [vmem:[%s559] sm:$0xff]
    %s561 = scalar_lea.vmem %s3, 32
    %v562 = vld [vmem:[%s561] sm:$0xff]
    %564 = vset.pattern.permute.xlu0 0
    %565 = vperm.xlu0 %564, %v562
    %v566 = vpop.permute.xlu0 %565
    %v569 = vsel %vm91, %v560, 0
    %571 = vmatprep.subr.mxu0 %v543
    %572 = vmatpush1.msra.mxu0 %v535
    %573 = vmatprep.subr.mxu0 %v512
    %574 = vmatpush1.msra.mxu0 %v511
    %575 = vmatprep.subr.mxu0 %v557
    %576 = vmatpush1.msra.mxu0 %v550
    %577 = vmatprep.subr.mxu0 0.0
    %578 = vmatpush1.msra.mxu0 0.0
    %579 = vmatprep.subr.mxu0 0.0
    %580 = vmatpush1.msra.mxu0 0.0
    %581 = vmatprep.subr.mxu0 0.0
    %582 = vmatpush1.msra.mxu0 0.0
    %583 = vmatprep.subr.mxu0 0.0
    %584 = vmatpush1.msra.mxu0 0.0
    %585 = vmatprep.subr.mxu0 0.0
    %586 = vmatpush1.msra.mxu0 0.0
    %587 = vmatprep.subr.mxu0 0.0
    %588 = vmatpush1.msra.mxu0 0.0
    %589 = vmatprep.subr.mxu0 0.0
    %590 = vmatpush1.msra.mxu0 0.0
    %591 = vmatprep.subr.mxu0 0.0
    %592 = vmatpush1.msra.mxu0 0.0
    %593 = vmatprep.subr.mxu0 0.0
    %594 = vmatpush1.msra.mxu0 0.0
    %595 = vmatprep.subr.mxu0 0.0
    %596 = vmatpush1.msra.mxu0 0.0
    %597 = vmatprep.subr.mxu0 0.0
    %598 = vmatpush1.msra.mxu0 0.0
    %599 = vmatprep.subr.mxu0 0.0
    %600 = vmatpush1.msra.mxu0 0.0
    %601 = vmatprep.subr.mxu0 0.0
    %602 = vmatpush1.msra.mxu0 0.0
    %603 = vmatprep.subr.mxu0 0.0
    %604 = vmatpush1.msra.mxu0 0.0
    %605 = vmatprep.subr.mxu0 0.0
    %606 = vmatpush1.msra.mxu0 0.0
    %607 = vmatprep.subr.mxu0 0.0
    %608 = vmatpush1.msra.mxu0 0.0
    %609 = vmatprep.subr.mxu0 0.0
    %610 = vmatpush1.msra.mxu0 0.0
    %611 = vmatprep.subr.mxu0 0.0
    %612 = vmatpush1.msra.mxu0 0.0
    %613 = vmatprep.subr.mxu0 0.0
    %614 = vmatpush1.msra.mxu0 0.0
    %615 = vmatprep.subr.mxu0 0.0
    %616 = vmatpush1.msra.mxu0 0.0
    %617 = vmatprep.subr.mxu0 0.0
    %618 = vmatpush1.msra.mxu0 0.0
    %619 = vmatprep.subr.mxu0 0.0
    %620 = vmatpush1.msra.mxu0 0.0
    %621 = vmatprep.subr.mxu0 0.0
    %622 = vmatpush1.msra.mxu0 0.0
    %623 = vmatprep.subr.mxu0 0.0
    %624 = vmatpush1.msra.mxu0 0.0
    %625 = vmatprep.subr.mxu0 0.0
    %626 = vmatpush1.msra.mxu0 0.0
    %627 = vmatprep.subr.mxu0 0.0
    %628 = vmatpush1.msra.mxu0 0.0
    %629 = vmatprep.subr.mxu0 0.0
    %630 = vmatpush1.msra.mxu0 0.0
    %631 = vmatprep.subr.mxu0 0.0
    %632 = vmatpush1.msra.mxu0 0.0
    %633 = vmatprep.subr.mxu0 0.0
    %634 = vmatpush1.msra.mxu0 0.0
    %635 = vmatprep.mubr.f32.mxu0 0.0
    %636 = vmatmul.mubr.f32.gmra.mrb[0].mxu0 %v569
    %v637 = vpop.f32.mrb[0].mxu0
    %v638 = vadd.f32 %v566, %v637
    %v639 = vpop.f32.mrb[0].mxu0
    %v640 = vadd.f32 %v566, %v639
    %641 = vdwg.mxu0
    %vm642 = vcmp.gt.f32.partialorder %v638, 0.0
    %vm643 = vcmp.gt.f32.partialorder %v640, 0.0
    %v644 = vmin.f32 %v638, 0.0
    %v645 = vmin.f32 %v640, 0.0
    %v646 = vmul.f32 %v644, 1.442695
    %v647 = vpow.pop %v646
    %v648 = vmul.f32 %v645, 1.442695
    %v649 = vpow.pop %v648
    %v650 = vsub.f32 %v647, 1.0
    %v651 = vsub.f32 %v649, 1.0
    %v652 = vsel %vm642, %v638, %v650
    %v653 = vsel %vm643, %v640, %v651
    %s654 = scalar_lea.vmem %s2, 16
    %v655 = vld [vmem:[%s654] sm:$0xff]
    %s656 = scalar_lea.vmem %s3, 40
    %v657 = vld [vmem:[%s656] sm:$0xff]
    %659 = vset.pattern.permute.xlu0 0
    %660 = vperm.xlu0 %659, %v657
    %v661 = vpop.permute.xlu0 %660
    %v664 = vsel %vm186, %v655, 0
    %666 = vmatprep.subr.mxu0 %v653
    %667 = vmatpush1.msra.mxu0 %v652
    %668 = vmatprep.subr.mxu0 0.0
    %669 = vmatpush1.msra.mxu0 0.0
    %670 = vmatprep.subr.mxu0 0.0
    %671 = vmatpush1.msra.mxu0 0.0
    %672 = vmatprep.subr.mxu0 0.0
    %673 = vmatpush1.msra.mxu0 0.0
    %674 = vmatprep.subr.mxu0 0.0
    %675 = vmatpush1.msra.mxu0 0.0
    %676 = vmatprep.subr.mxu0 0.0
    %677 = vmatpush1.msra.mxu0 0.0
    %678 = vmatprep.subr.mxu0 0.0
    %679 = vmatpush1.msra.mxu0 0.0
    %680 = vmatprep.subr.mxu0 0.0
    %681 = vmatpush1.msra.mxu0 0.0
    %682 = vmatprep.subr.mxu0 0.0
    %683 = vmatpush1.msra.mxu0 0.0
    %684 = vmatprep.subr.mxu0 0.0
    %685 = vmatpush1.msra.mxu0 0.0
    %686 = vmatprep.subr.mxu0 0.0
    %687 = vmatpush1.msra.mxu0 0.0
    %688 = vmatprep.subr.mxu0 0.0
    %689 = vmatpush1.msra.mxu0 0.0
    %690 = vmatprep.subr.mxu0 0.0
    %691 = vmatpush1.msra.mxu0 0.0
    %692 = vmatprep.subr.mxu0 0.0
    %693 = vmatpush1.msra.mxu0 0.0
    %694 = vmatprep.subr.mxu0 0.0
    %695 = vmatpush1.msra.mxu0 0.0
    %696 = vmatprep.subr.mxu0 0.0
    %697 = vmatpush1.msra.mxu0 0.0
    %698 = vmatprep.subr.mxu0 0.0
    %699 = vmatpush1.msra.mxu0 0.0
    %700 = vmatprep.subr.mxu0 0.0
    %701 = vmatpush1.msra.mxu0 0.0
    %702 = vmatprep.subr.mxu0 0.0
    %703 = vmatpush1.msra.mxu0 0.0
    %704 = vmatprep.subr.mxu0 0.0
    %705 = vmatpush1.msra.mxu0 0.0
    %706 = vmatprep.subr.mxu0 0.0
    %707 = vmatpush1.msra.mxu0 0.0
    %708 = vmatprep.subr.mxu0 0.0
    %709 = vmatpush1.msra.mxu0 0.0
    %710 = vmatprep.subr.mxu0 0.0
    %711 = vmatpush1.msra.mxu0 0.0
    %712 = vmatprep.subr.mxu0 0.0
    %713 = vmatpush1.msra.mxu0 0.0
    %714 = vmatprep.subr.mxu0 0.0
    %715 = vmatpush1.msra.mxu0 0.0
    %716 = vmatprep.subr.mxu0 0.0
    %717 = vmatpush1.msra.mxu0 0.0
    %718 = vmatprep.subr.mxu0 0.0
    %719 = vmatpush1.msra.mxu0 0.0
    %720 = vmatprep.subr.mxu0 0.0
    %721 = vmatpush1.msra.mxu0 0.0
    %722 = vmatprep.subr.mxu0 0.0
    %723 = vmatpush1.msra.mxu0 0.0
    %724 = vmatprep.subr.mxu0 0.0
    %725 = vmatpush1.msra.mxu0 0.0
    %726 = vmatprep.subr.mxu0 0.0
    %727 = vmatpush1.msra.mxu0 0.0
    %728 = vmatprep.subr.mxu0 0.0
    %729 = vmatpush1.msra.mxu0 0.0
    %730 = vmatprep.mubr.f32.mxu0 0.0
    %731 = vmatmul.mubr.f32.gmra.mrb[0].mxu0 %v664
    %v732 = vpop.f32.mrb[0].mxu0
    %v733 = vadd.f32 %v661, %v732
    %v734 = vpop.f32.mrb[0].mxu0
    %v735 = vadd.f32 %v661, %v734
    %736 = vdwg.mxu0
    %vm737 = vcmp.gt.f32.partialorder %v733, 0.0
    %vm738 = vcmp.gt.f32.partialorder %v735, 0.0
    %v739 = vmin.f32 %v733, 0.0
    %v740 = vmin.f32 %v735, 0.0
    %v741 = vmul.f32 %v739, 1.442695
    %v742 = vpow.pop %v741
    %v743 = vmul.f32 %v740, 1.442695
    %v744 = vpow.pop %v743
    %v745 = vsub.f32 %v742, 1.0
    %v746 = vsub.f32 %v744, 1.0
    %v747 = vsel %vm737, %v733, %v745
    %v748 = vsel %vm738, %v735, %v746
    %v749 = vadd.f32 %v511, %v747
    %v750 = vadd.f32 %v512, %v748
    %752 = vrot.lane.b32.xlu0 %v749, 16
    %v753 = vpop.permute.xlu0 %752
    %755 = vst.msk [vmem:[#allocation2] sm:$0xff] %vm39, %v753
    %756 = vst.msk [vmem:[#allocation2 + $0x8] sm:$0xff] %vm24, %v753
    %758 = vrot.lane.b32.xlu0 %v750, 48
    %v759 = vpop.permute.xlu0 %758
    %761 = vst.msk [vmem:[#allocation2 + $0x8] sm:$0xff] %vm46, %v759
    %762 = vst.msk [vmem:[#allocation2 + $0x10] sm:$0xff] %vm48, %v759
    %v763 = vld [vmem:[#allocation2] sm:$0xff]
    %v764 = vld [vmem:[#allocation2 + $0x8] sm:$0xff]
    %v765 = vld [vmem:[#allocation2 + $0x10] sm:$0xff]
    %768 = vrot.lane.b32.xlu0 %v763, 112
    %v769 = vpop.permute.xlu0 %768
    %770 = vrot.lane.b32.xlu0 %v764, 112
    %v771 = vpop.permute.xlu0 %770
    %vm772 = vcmask 916480
    %v773 = vsel %vm772, %v769, %v771
    %776 = vrot.lane.b32.xlu0 %v764, 80
    %v777 = vpop.permute.xlu0 %776
    %778 = vrot.lane.b32.xlu0 %v765, 80
    %v779 = vpop.permute.xlu0 %778
    %vm780 = vcmask 654336
    %v781 = vsel %vm780, %v777, %v779
    %783 = vrot.lane.b32.xlu0 %v763, 111
    %v784 = vpop.permute.xlu0 %783
    %785 = vrot.lane.b32.xlu0 %v764, 111
    %v786 = vpop.permute.xlu0 %785
    %v787 = vsel %vm74, %v784, %v786
    %789 = vrot.lane.b32.xlu0 %v764, 79
    %v790 = vpop.permute.xlu0 %789
    %791 = vrot.lane.b32.xlu0 %v765, 79
    %v792 = vpop.permute.xlu0 %791
    %v793 = vsel %vm81, %v790, %v792
    %795 = vrot.lane.b32.xlu0 %v763, 110
    %v796 = vpop.permute.xlu0 %795
    %797 = vrot.lane.b32.xlu0 %v764, 110
    %v798 = vpop.permute.xlu0 %797
    %vm799 = vcmask 900096
    %v800 = vsel %vm799, %v796, %v798
    %802 = vrot.lane.b32.xlu0 %v764, 78
    %v803 = vpop.permute.xlu0 %802
    %804 = vrot.lane.b32.xlu0 %v765, 78
    %v805 = vpop.permute.xlu0 %804
    %vm806 = vcmask 637952
    %v807 = vsel %vm806, %v803, %v805
    %809 = vrot.lane.b32.xlu0 %v763, 109
    %v810 = vpop.permute.xlu0 %809
    %811 = vrot.lane.b32.xlu0 %v764, 109
    %v812 = vpop.permute.xlu0 %811
    %v813 = vsel %vm311, %v810, %v812
    %815 = vrot.lane.b32.xlu0 %v764, 77
    %v816 = vpop.permute.xlu0 %815
    %817 = vrot.lane.b32.xlu0 %v765, 77
    %v818 = vpop.permute.xlu0 %817
    %v819 = vsel %vm318, %v816, %v818
    %v821 = vld [vmem:[%s4] sm:$0xff]
    %v822 = vld [vmem:[%s4 + $0x8] sm:$0xff]
    %vm823 = vcmask 261120
    %v825 = vsel %vm823, %v821, 0
    %v828 = vsel %vm823, %v822, 0
    %830 = vmatprep.subr.mxu0 %v781
    %831 = vmatpush1.msra.mxu0 %v773
    %832 = vmatprep.subr.mxu0 %v793
    %833 = vmatpush1.msra.mxu0 %v787
    %834 = vmatprep.subr.mxu0 %v807
    %835 = vmatpush1.msra.mxu0 %v800
    %836 = vmatprep.subr.mxu0 %v819
    %837 = vmatpush1.msra.mxu0 %v813
    %838 = vmatprep.subr.mxu0 0.0
    %839 = vmatpush1.msra.mxu0 0.0
    %840 = vmatprep.subr.mxu0 0.0
    %841 = vmatpush1.msra.mxu0 0.0
    %842 = vmatprep.subr.mxu0 0.0
    %843 = vmatpush1.msra.mxu0 0.0
    %844 = vmatprep.subr.mxu0 0.0
    %845 = vmatpush1.msra.mxu0 0.0
    %846 = vmatprep.subr.mxu0 0.0
    %847 = vmatpush1.msra.mxu0 0.0
    %848 = vmatprep.subr.mxu0 0.0
    %849 = vmatpush1.msra.mxu0 0.0
    %850 = vmatprep.subr.mxu0 0.0
    %851 = vmatpush1.msra.mxu0 0.0
    %852 = vmatprep.subr.mxu0 0.0
    %853 = vmatpush1.msra.mxu0 0.0
    %854 = vmatprep.subr.mxu0 0.0
    %855 = vmatpush1.msra.mxu0 0.0
    %856 = vmatprep.subr.mxu0 0.0
    %857 = vmatpush1.msra.mxu0 0.0
    %858 = vmatprep.subr.mxu0 0.0
    %859 = vmatpush1.msra.mxu0 0.0
    %860 = vmatprep.subr.mxu0 0.0
    %861 = vmatpush1.msra.mxu0 0.0
    %862 = vmatprep.subr.mxu0 0.0
    %863 = vmatpush1.msra.mxu0 0.0
    %864 = vmatprep.subr.mxu0 0.0
    %865 = vmatpush1.msra.mxu0 0.0
    %866 = vmatprep.subr.mxu0 0.0
    %867 = vmatpush1.msra.mxu0 0.0
    %868 = vmatprep.subr.mxu0 0.0
    %869 = vmatpush1.msra.mxu0 0.0
    %870 = vmatprep.subr.mxu0 0.0
    %871 = vmatpush1.msra.mxu0 0.0
    %872 = vmatprep.subr.mxu0 0.0
    %873 = vmatpush1.msra.mxu0 0.0
    %874 = vmatprep.subr.mxu0 0.0
    %875 = vmatpush1.msra.mxu0 0.0
    %876 = vmatprep.subr.mxu0 0.0
    %877 = vmatpush1.msra.mxu0 0.0
    %878 = vmatprep.subr.mxu0 0.0
    %879 = vmatpush1.msra.mxu0 0.0
    %880 = vmatprep.subr.mxu0 0.0
    %881 = vmatpush1.msra.mxu0 0.0
    %882 = vmatprep.subr.mxu0 0.0
    %883 = vmatpush1.msra.mxu0 0.0
    %884 = vmatprep.subr.mxu0 0.0
    %885 = vmatpush1.msra.mxu0 0.0
    %886 = vmatprep.subr.mxu0 0.0
    %887 = vmatpush1.msra.mxu0 0.0
    %888 = vmatprep.subr.mxu0 0.0
    %889 = vmatpush1.msra.mxu0 0.0
    %890 = vmatprep.subr.mxu0 0.0
    %891 = vmatpush1.msra.mxu0 0.0
    %892 = vmatprep.subr.mxu0 0.0
    %893 = vmatpush1.msra.mxu0 0.0
    %894 = vmatprep.mubr.f32.mxu0 0.0
    %895 = vmatmul.mubr.f32.gmra.mrb[0].mxu0 %v825
    %v896 = vpop.f32.mrb[0].mxu0
    %v897 = vadd.f32 0.0, %v896
    %v898 = vpop.f32.mrb[0].mxu0
    %v899 = vadd.f32 0.0, %v898
    %900 = vmatprep.mubr.f32.mxu0 0.0
    %901 = vmatmul.mubr.f32.gmra.mrb[0].mxu0 %v828
    %v902 = vpop.f32.mrb[0].mxu0
    %v903 = vadd.f32 0.0, %v902
    %v904 = vpop.f32.mrb[0].mxu0
    %v905 = vadd.f32 0.0, %v904
    %906 = vdwg.mxu0
    %v907 = vlaneseq
    %v908 = vshrl.u32 %v907, 7
    %v909 = vadd.s32 %v908, 8
    %v910 = vadd.s32 %v908, 16
    %v911 = vadd.s32 %v908, 24
    %v912 = vadd.s32 %v908, 32
    %v913 = vadd.s32 %v908, 40
    %v914 = vadd.s32 %v908, 48
    %v915 = vadd.s32 %v908, 56
    %v916 = vadd.s32 %v908, 64
    %v917 = vadd.s32 %v908, 72
    %v918 = vadd.s32 %v908, 80
    %v919 = vadd.s32 %v908, 88
    %v920 = vadd.s32 %v908, 96
    %v921 = vadd.s32 %v908, 104
    %v922 = vadd.s32 %v908, 112
    %v923 = vadd.s32 %v908, 120
    %v924 = vlaneseq
    %v925 = vand.u32 %v924, 127
    %v926 = vmul.u32 %v925, 2
    %vm927 = vcmp.eq.s32.totalorder %v908, %v926
    %vm928 = vcmp.eq.s32.totalorder %v909, %v926
    %vm929 = vcmp.eq.s32.totalorder %v910, %v926
    %vm930 = vcmp.eq.s32.totalorder %v911, %v926
    %vm931 = vcmp.eq.s32.totalorder %v912, %v926
    %vm932 = vcmp.eq.s32.totalorder %v913, %v926
    %vm933 = vcmp.eq.s32.totalorder %v914, %v926
    %vm934 = vcmp.eq.s32.totalorder %v915, %v926
    %vm935 = vcmp.eq.s32.totalorder %v916, %v926
    %vm936 = vcmp.eq.s32.totalorder %v917, %v926
    %vm937 = vcmp.eq.s32.totalorder %v918, %v926
    %vm938 = vcmp.eq.s32.totalorder %v919, %v926
    %vm939 = vcmp.eq.s32.totalorder %v920, %v926
    %vm940 = vcmp.eq.s32.totalorder %v921, %v926
    %vm941 = vcmp.eq.s32.totalorder %v922, %v926
    %vm942 = vcmp.eq.s32.totalorder %v923, %v926
    %v943 = vsel %vm927, 1, 0
    %v944 = vsel %vm928, 1, 0
    %v945 = vsel %vm929, 1, 0
    %v946 = vsel %vm930, 1, 0
    %v947 = vsel %vm931, 1, 0
    %v948 = vsel %vm932, 1, 0
    %v949 = vsel %vm933, 1, 0
    %v950 = vsel %vm934, 1, 0
    %v951 = vsel %vm935, 1, 0
    %v952 = vsel %vm936, 1, 0
    %v953 = vsel %vm937, 1, 0
    %v954 = vsel %vm938, 1, 0
    %v955 = vsel %vm939, 1, 0
    %v956 = vsel %vm940, 1, 0
    %v957 = vsel %vm941, 1, 0
    %v958 = vsel %vm942, 1, 0
    %v959 = vcvt.s32.f32 %v943
    %v960 = vcvt.s32.f32 %v944
    %v961 = vcvt.s32.f32 %v945
    %v962 = vcvt.s32.f32 %v946
    %v963 = vcvt.s32.f32 %v947
    %v964 = vcvt.s32.f32 %v948
    %v965 = vcvt.s32.f32 %v949
    %v966 = vcvt.s32.f32 %v950
    %v967 = vcvt.s32.f32 %v951
    %v968 = vcvt.s32.f32 %v952
    %v969 = vcvt.s32.f32 %v953
    %v970 = vcvt.s32.f32 %v954
    %v971 = vcvt.s32.f32 %v955
    %v972 = vcvt.s32.f32 %v956
    %v973 = vcvt.s32.f32 %v957
    %v974 = vcvt.s32.f32 %v958
    %v975 = vld [vmem:[%s5] sm:$0xff]
    %v976 = vld [vmem:[%s5 + $0x8] sm:$0xff]
    %978 = vset.pattern.permute.xlu0 0
    %979 = vperm.xlu0 %978, %v975
    %v980 = vpop.permute.xlu0 %979
    %983 = vset.pattern.permute.xlu0 0
    %984 = vperm.xlu0 %983, %v976
    %v985 = vpop.permute.xlu0 %984
    %987 = vmatprep.subr.mxu0 0.0
    %988 = vmatpush1.msra.mxu0 %v959
    %989 = vmatprep.subr.mxu0 0.0
    %990 = vmatpush1.msra.mxu0 %v960
    %991 = vmatprep.subr.mxu0 0.0
    %992 = vmatpush1.msra.mxu0 %v961
    %993 = vmatprep.subr.mxu0 0.0
    %994 = vmatpush1.msra.mxu0 %v962
    %995 = vmatprep.subr.mxu0 0.0
    %996 = vmatpush1.msra.mxu0 %v963
    %997 = vmatprep.subr.mxu0 0.0
    %998 = vmatpush1.msra.mxu0 %v964
    %999 = vmatprep.subr.mxu0 0.0
    %1000 = vmatpush1.msra.mxu0 %v965
    %1001 = vmatprep.subr.mxu0 0.0
    %1002 = vmatpush1.msra.mxu0 %v966
    %1003 = vmatprep.subr.mxu0 0.0
    %1004 = vmatpush1.msra.mxu0 %v967
    %1005 = vmatprep.subr.mxu0 0.0
    %1006 = vmatpush1.msra.mxu0 %v968
    %1007 = vmatprep.subr.mxu0 0.0
    %1008 = vmatpush1.msra.mxu0 %v969
    %1009 = vmatprep.subr.mxu0 0.0
    %1010 = vmatpush1.msra.mxu0 %v970
    %1011 = vmatprep.subr.mxu0 0.0
    %1012 = vmatpush1.msra.mxu0 %v971
    %1013 = vmatprep.subr.mxu0 0.0
    %1014 = vmatpush1.msra.mxu0 %v972
    %1015 = vmatprep.subr.mxu0 0.0
    %1016 = vmatpush1.msra.mxu0 %v973
    %1017 = vmatprep.subr.mxu0 0.0
    %1018 = vmatpush1.msra.mxu0 %v974
    %1019 = vmatprep.subr.mxu0 0.0
    %1020 = vmatpush1.msra.mxu0 0.0
    %1021 = vmatprep.subr.mxu0 0.0
    %1022 = vmatpush1.msra.mxu0 0.0
    %1023 = vmatprep.subr.mxu0 0.0
    %1024 = vmatpush1.msra.mxu0 0.0
    %1025 = vmatprep.subr.mxu0 0.0
    %1026 = vmatpush1.msra.mxu0 0.0
    %1027 = vmatprep.subr.mxu0 0.0
    %1028 = vmatpush1.msra.mxu0 0.0
    %1029 = vmatprep.subr.mxu0 0.0
    %1030 = vmatpush1.msra.mxu0 0.0
    %1031 = vmatprep.subr.mxu0 0.0
    %1032 = vmatpush1.msra.mxu0 0.0
    %1033 = vmatprep.subr.mxu0 0.0
    %1034 = vmatpush1.msra.mxu0 0.0
    %1035 = vmatprep.subr.mxu0 0.0
    %1036 = vmatpush1.msra.mxu0 0.0
    %1037 = vmatprep.subr.mxu0 0.0
    %1038 = vmatpush1.msra.mxu0 0.0
    %1039 = vmatprep.subr.mxu0 0.0
    %1040 = vmatpush1.msra.mxu0 0.0
    %1041 = vmatprep.subr.mxu0 0.0
    %1042 = vmatpush1.msra.mxu0 0.0
    %1043 = vmatprep.subr.mxu0 0.0
    %1044 = vmatpush1.msra.mxu0 0.0
    %1045 = vmatprep.subr.mxu0 0.0
    %1046 = vmatpush1.msra.mxu0 0.0
    %1047 = vmatprep.subr.mxu0 0.0
    %1048 = vmatpush1.msra.mxu0 0.0
    %1049 = vmatprep.subr.mxu0 0.0
    %1050 = vmatpush1.msra.mxu0 0.0
    %1051 = vmatprep.mubr.f32.mxu0 0.0
    %1052 = vmatmul.mubr.f32.gmra.mrb[0].mxu0 %v897
    %v1053 = vpop.f32.mrb[0].mxu0
    %v1054 = vadd.f32 %v980, %v1053
    %v1055 = vpop.f32.mrb[0].mxu0
    %1056 = vmatprep.mubr.f32.mxu0 0.0
    %1057 = vmatmul.mubr.f32.gmra.mrb[0].mxu0 %v903
    %v1058 = vpop.f32.mrb[0].mxu0
    %v1059 = vadd.f32 %v985, %v1058
    %v1060 = vpop.f32.mrb[0].mxu0
    %1061 = vdwg.mxu0
    %vm1062 = vcmp.gt.f32.partialorder %v1054, 0.0
    %vm1063 = vcmp.gt.f32.partialorder %v1059, 0.0
    %v1064 = vmin.f32 %v1054, 0.0
    %v1065 = vmin.f32 %v1059, 0.0
    %v1066 = vmul.f32 %v1064, 1.442695
    %v1067 = vpow.pop %v1066
    %v1068 = vmul.f32 %v1065, 1.442695
    %v1069 = vpow.pop %v1068
    %v1070 = vsub.f32 %v1067, 1.0
    %v1071 = vsub.f32 %v1069, 1.0
    %v1072 = vsel %vm1062, %v1054, %v1070
    %v1073 = vsel %vm1063, %v1059, %v1071
    %vm1074 = vcmask 515072
    %1075 = vst.msk [vmem:[#allocation3] sm:$0xff] %vm1074, %v1072
    %1076 = vst.msk [vmem:[#allocation3 + $0x8] sm:$0xff] %vm1074, %v1073
    %1077 = vmatprep.subr.mxu0 0.0
    %1078 = vmatpush1.msra.mxu0 %v959
    %1079 = vmatprep.subr.mxu0 0.0
    %1080 = vmatpush1.msra.mxu0 %v960
    %1081 = vmatprep.subr.mxu0 0.0
    %1082 = vmatpush1.msra.mxu0 %v961
    %1083 = vmatprep.subr.mxu0 0.0
    %1084 = vmatpush1.msra.mxu0 %v962
    %1085 = vmatprep.subr.mxu0 0.0
    %1086 = vmatpush1.msra.mxu0 %v963
    %1087 = vmatprep.subr.mxu0 0.0
    %1088 = vmatpush1.msra.mxu0 %v964
    %1089 = vmatprep.subr.mxu0 0.0
    %1090 = vmatpush1.msra.mxu0 %v965
    %1091 = vmatprep.subr.mxu0 0.0
    %1092 = vmatpush1.msra.mxu0 %v966
    %1093 = vmatprep.subr.mxu0 0.0
    %1094 = vmatpush1.msra.mxu0 %v967
    %1095 = vmatprep.subr.mxu0 0.0
    %1096 = vmatpush1.msra.mxu0 %v968
    %1097 = vmatprep.subr.mxu0 0.0
    %1098 = vmatpush1.msra.mxu0 %v969
    %1099 = vmatprep.subr.mxu0 0.0
    %1100 = vmatpush1.msra.mxu0 %v970
    %1101 = vmatprep.subr.mxu0 0.0
    %1102 = vmatpush1.msra.mxu0 %v971
    %1103 = vmatprep.subr.mxu0 0.0
    %1104 = vmatpush1.msra.mxu0 %v972
    %1105 = vmatprep.subr.mxu0 0.0
    %1106 = vmatpush1.msra.mxu0 %v973
    %1107 = vmatprep.subr.mxu0 0.0
    %1108 = vmatpush1.msra.mxu0 %v974
    %1109 = vmatprep.subr.mxu0 0.0
    %1110 = vmatpush1.msra.mxu0 0.0
    %1111 = vmatprep.subr.mxu0 0.0
    %1112 = vmatpush1.msra.mxu0 0.0
    %1113 = vmatprep.subr.mxu0 0.0
    %1114 = vmatpush1.msra.mxu0 0.0
    %1115 = vmatprep.subr.mxu0 0.0
    %1116 = vmatpush1.msra.mxu0 0.0
    %1117 = vmatprep.subr.mxu0 0.0
    %1118 = vmatpush1.msra.mxu0 0.0
    %1119 = vmatprep.subr.mxu0 0.0
    %1120 = vmatpush1.msra.mxu0 0.0
    %1121 = vmatprep.subr.mxu0 0.0
    %1122 = vmatpush1.msra.mxu0 0.0
    %1123 = vmatprep.subr.mxu0 0.0
    %1124 = vmatpush1.msra.mxu0 0.0
    %1125 = vmatprep.subr.mxu0 0.0
    %1126 = vmatpush1.msra.mxu0 0.0
    %1127 = vmatprep.subr.mxu0 0.0
    %1128 = vmatpush1.msra.mxu0 0.0
    %1129 = vmatprep.subr.mxu0 0.0
    %1130 = vmatpush1.msra.mxu0 0.0
    %1131 = vmatprep.subr.mxu0 0.0
    %1132 = vmatpush1.msra.mxu0 0.0
    %1133 = vmatprep.subr.mxu0 0.0
    %1134 = vmatpush1.msra.mxu0 0.0
    %1135 = vmatprep.subr.mxu0 0.0
    %1136 = vmatpush1.msra.mxu0 0.0
    %1137 = vmatprep.subr.mxu0 0.0
    %1138 = vmatpush1.msra.mxu0 0.0
    %1139 = vmatprep.subr.mxu0 0.0
    %1140 = vmatpush1.msra.mxu0 0.0
    %1141 = vmatprep.mubr.f32.mxu0 0.0
    %1142 = vmatmul.mubr.f32.gmra.mrb[0].mxu0 %v899
    %v1143 = vpop.f32.mrb[0].mxu0
    %v1144 = vadd.f32 %v980, %v1143
    %v1145 = vpop.f32.mrb[0].mxu0
    %1146 = vmatprep.mubr.f32.mxu0 0.0
    %1147 = vmatmul.mubr.f32.gmra.mrb[0].mxu0 %v905
    %v1148 = vpop.f32.mrb[0].mxu0
    %v1149 = vadd.f32 %v985, %v1148
    %v1150 = vpop.f32.mrb[0].mxu0
    %1151 = vdwg.mxu0
    %vm1152 = vcmp.gt.f32.partialorder %v1144, 0.0
    %vm1153 = vcmp.gt.f32.partialorder %v1149, 0.0
    %v1154 = vmin.f32 %v1144, 0.0
    %v1155 = vmin.f32 %v1149, 0.0
    %v1156 = vmul.f32 %v1154, 1.442695
    %v1157 = vpow.pop %v1156
    %v1158 = vmul.f32 %v1155, 1.442695
    %v1159 = vpow.pop %v1158
    %v1160 = vsub.f32 %v1157, 1.0
    %v1161 = vsub.f32 %v1159, 1.0
    %v1162 = vsel %vm1152, %v1144, %v1160
    %v1163 = vsel %vm1153, %v1149, %v1161
    %s1164 = scalar_lea.vmem [#allocation3], 16
    %1165 = vst.msk [vmem:[%s1164] sm:$0xff] %vm1074, %v1162
    %1166 = vst.msk [vmem:[%s1164 + $0x8] sm:$0xff] %vm1074, %v1163
    // Predicated region
    $region26: #{film_downsampling.1} parent=1 // pred_check
      _
    $region27: #{film_downsampling.1} parent=1 // pred_check_branch
      %1168 = sbr.rel (0) target = $region29
    $region28: #{film_downsampling.1} parent=1 // pred_region
      %s1170 = ssub.s32 512, 512
      %1171 = vsyncadd [#allocation4], %s1170
      %s1172 = sshll.u32 [#allocation3], 4
      %s1173 = int_to_ptr.vmem [resolvable:$true] %s1172
      %1178 = dma.vmem_to_hbm [thread:$0]  %s1173, 512, %s6, [#allocation4], 128, 128, 8
    $region29: #{film_downsampling.1} parent=1 // pred_fallthru
      _
    // Predicated region
    $region30: #{film_downsampling.1} parent=1 // pred_check
      _
    $region31: #{film_downsampling.1} parent=1 // pred_check_branch
      %1180 = sbr.rel (0) target = $region33
    $region32: #{film_downsampling.1} parent=1 // pred_region
      %1181 = dma.done [#allocation4], 512
    $region33: #{film_downsampling.1} parent=1 // pred_fallthru
      _
    %1182 = vsyncpa [#allocation4], 1

</llo_original>
